<compile_context>
chip_gen: v7x
topology: tpu7x:2x2x1
jax: 0.10.0
libtpu: 0.0.40
codegen_flags: <defaults>
</compile_context>

<pallas_src>
import functools

import jax
import jax.numpy as jnp
from jax.experimental import pallas as pl
from jax.experimental.pallas import tpu as pltpu

LANE = 128


def _round_up(x, m):
    return ((x + m - 1) // m) * m


# ----------------------------------------------------------------------------
# Fused Pallas kernel: all GCN layers + log_softmax in one call
# ----------------------------------------------------------------------------
def fused_markov_gcnr_kernel(*refs, nlayers, alpha, ntargets):
    """refs layout:
         refs[0]            : x0   [Np, F_pad]        f32 (padded features)
         refs[1 + 3l + 0]   : A_l  [Np, Np]           bf16 (normalized adjacency)
         refs[1 + 3l + 1]   : W_l  [Din_pad, Dout_pad] bf16
         refs[1 + 3l + 2]   : b_l  [1, Dout_pad]      f32
         refs[-1]           : out  [Np, C_pad]        f32 (row-wise log_softmax)
       Intermediate activations live entirely in vregs/VMEM.
    """
    x0_ref = refs[0]
    o_ref = refs[-1]
    layer_refs = refs[1:-1]

    def conv(l, x_f32):
        a_ref = layer_refs[3 * l + 0]
        w_ref = layer_refs[3 * l + 1]
        b_ref = layer_refs[3 * l + 2]
        # Both matmuls run on the MXU in bf16 with f32 accumulation.
        h = jnp.dot(x_f32.astype(jnp.bfloat16), w_ref[...],
                    preferred_element_type=jnp.float32)
        y = jnp.dot(a_ref[...], h.astype(jnp.bfloat16),
                    preferred_element_type=jnp.float32)
        return y + b_ref[...]                       # f32 epilogue (bias broadcast)

    # Layer 0: dropout is identity in eval mode, no activation before it.
    x = conv(0, x0_ref[...])
    x_prev = x

    for l in range(1, nlayers):
        xin = jnp.maximum(x, 0.0)                   # ReLU (useleakyrelu=False)
        y = conv(l, xin)                            # dropout identity (eval)
        if l < nlayers - 1:
            x = alpha * y + (1.0 - alpha) * x_prev  # Markov residual mix
        else:
            x = y

    # Row-wise log_softmax over the first `ntargets` (real) class columns;
    # padded lane columns are masked so they do not perturb the result.
    col = jax.lax.broadcasted_iota(jnp.int32, x.shape, 1)
    logits = jnp.where(col < ntargets, x, jnp.float32(-1e30))
    m = jnp.max(logits, axis=-1, keepdims=True)
    s = logits - m
    lse = jnp.log(jnp.sum(jnp.exp(s), axis=-1, keepdims=True))
    o_ref[...] = (s - lse).astype(o_ref.dtype)


# ----------------------------------------------------------------------------
# Wrapper: pad to lane-dense shapes, cast matmul operands to bf16, one call
# ----------------------------------------------------------------------------
def markov_gcnr_forward(features, a_hats, ws, bs, *, alpha):
    nlayers = len(a_hats)
    n, f_in = features.shape
    ntargets = ws[-1].shape[1]

    n_pad = _round_up(n, LANE)        # nodes padded so A_hat is lane/MXU dense
    f_pad = _round_up(f_in, LANE)
    c_pad = _round_up(ntargets, LANE)

    # Padded inputs (zeros in padded rows/cols never contaminate real rows:
    # A_hat real rows have zeros in padded source columns, W padded rows/cols
    # are zero, padded class columns are masked before log_softmax).
    x0 = jnp.zeros((n_pad, f_pad), jnp.float32).at[:n, :f_in].set(
        features.astype(jnp.float32))

    inputs = [x0]
    in_specs = [pl.BlockSpec((n_pad, f_pad), lambda i: (0, 0))]

    for l in range(nlayers):
        din, dout = ws[l].shape
        din_p = _round_up(din, LANE)
        dout_p = _round_up(dout, LANE)
        a_p = jnp.zeros((n_pad, n_pad), jnp.bfloat16).at[:n, :n].set(
            a_hats[l].astype(jnp.bfloat16))
        w_p = jnp.zeros((din_p, dout_p), jnp.bfloat16).at[:din, :dout].set(
            ws[l].astype(jnp.bfloat16))
        b_p = jnp.zeros((1, dout_p), jnp.float32).at[0, :dout].set(
            bs[l].astype(jnp.float32))
        inputs += [a_p, w_p, b_p]
        in_specs += [
            pl.BlockSpec((n_pad, n_pad), lambda i: (0, 0)),
            pl.BlockSpec((din_p, dout_p), lambda i: (0, 0)),
            pl.BlockSpec((1, dout_p), lambda i: (0, 0)),
        ]

    kernel = functools.partial(fused_markov_gcnr_kernel,
                               nlayers=nlayers, alpha=alpha, ntargets=ntargets)

    out_pad = pl.pallas_call(
        kernel,
        out_shape=jax.ShapeDtypeStruct((n_pad, c_pad), jnp.float32),
        grid=(1,),
        in_specs=in_specs,
        out_specs=pl.BlockSpec((n_pad, c_pad), lambda i: (0, 0)),
        compiler_params=pltpu.CompilerParams(
            dimension_semantics=("arbitrary",)),
    )(*inputs)

    return out_pad[:n, :ntargets]


# ----------------------------------------------------------------------------
# Glue: normalized adjacency (GCNConv gcn_norm with self-loops)
# ----------------------------------------------------------------------------
def build_a_hat(edge_index, edge_weight, n):
    src = edge_index[0]
    dst = edge_index[1]
    a = jnp.zeros((n, n), jnp.float32).at[dst, src].add(edge_weight)
    a = a + jnp.eye(n, dtype=jnp.float32)          # self-loops, weight 1
    deg = jnp.sum(a, axis=1)
    dinv = jax.lax.rsqrt(deg)
    return a * dinv[:, None] * dinv[None, :]


# ----------------------------------------------------------------------------
# Main
# ----------------------------------------------------------------------------
if __name__ == "__main__":
    key = jax.random.PRNGKey(0)

    N = 16          # graph nodes
    F_IN = 8        # input feature dim
    NDIM = 32       # hidden dim
    NTARGETS = 4    # output classes
    NLAYERS = 3
    NEDGES = 40     # edges per layer
    ALPHA = 0.5

    keys = jax.random.split(key, 16)

    features = jax.random.normal(keys[0], (N, F_IN), jnp.float32)

    edge_indices, edge_weights = [], []
    for l in range(NLAYERS):
        ei = jax.random.randint(keys[1 + l], (2, NEDGES), 0, N, dtype=jnp.int32)
        edge_indices.append(ei)
        if l == 0:
            ew = jnp.ones((NEDGES,), jnp.float32)   # layer 0: edge_weight=None
        else:
            ew = jax.random.uniform(keys[4 + l], (NEDGES,), jnp.float32,
                                    minval=0.5, maxval=1.5)
        edge_weights.append(ew)

    a_hats = [build_a_hat(edge_indices[l], edge_weights[l], N)
              for l in range(NLAYERS)]

    dims = [(F_IN, NDIM)] + [(NDIM, NDIM)] * (NLAYERS - 2) + [(NDIM, NTARGETS)]
    ws, bs = [], []
    for l, (din, dout) in enumerate(dims):
        scale = 1.0 / jnp.sqrt(jnp.float32(din))
        ws.append(scale * jax.random.normal(keys[8 + l], (din, dout), jnp.float32))
        bs.append(0.01 * jax.random.normal(keys[12 + l], (dout,), jnp.float32))

    fwd = jax.jit(functools.partial(markov_gcnr_forward, alpha=ALPHA))
    out = fwd(features, a_hats, ws, bs)
    out = jax.block_until_ready(out)

    assert out.shape == (N, NTARGETS)
    assert bool(jnp.all(jnp.isfinite(out)))
    # rows of log_softmax should sum (in prob space) to ~1
    assert bool(jnp.allclose(jnp.sum(jnp.exp(out), axis=1), 1.0, atol=1e-5))

    print("KERNEL_OK")
</pallas_src>

<mosaic_0001>
module attributes {stable_mosaic.version = 11 : i64} {
  func.func @fused_markov_gcnr_kernel(%arg0: i32, %arg1: memref<128x128xf32, #tpu.memory_space<vmem>>, %arg2: memref<128x128xbf16, #tpu.memory_space<vmem>>, %arg3: memref<128x128xbf16, #tpu.memory_space<vmem>>, %arg4: memref<1x128xf32, #tpu.memory_space<vmem>>, %arg5: memref<128x128xbf16, #tpu.memory_space<vmem>>, %arg6: memref<128x128xbf16, #tpu.memory_space<vmem>>, %arg7: memref<1x128xf32, #tpu.memory_space<vmem>>, %arg8: memref<128x128xbf16, #tpu.memory_space<vmem>>, %arg9: memref<128x128xbf16, #tpu.memory_space<vmem>>, %arg10: memref<1x128xf32, #tpu.memory_space<vmem>>, %arg11: memref<128x128xf32, #tpu.memory_space<vmem>>) attributes {dimension_semantics = [#tpu.dimension_semantics<arbitrary>], iteration_bounds = array<i64: 1>, scalar_prefetch = 0 : i64, scratch_operands = 0 : i64, tpu.core_type = #tpu.core_type<tc>, window_params = [{pipeline_mode = #tpu.pipeline_mode<synchronous>, transform_indices = @transform_0, window_bounds = array<i64: 128, 128>}, {pipeline_mode = #tpu.pipeline_mode<synchronous>, transform_indices = @transform_1, window_bounds = array<i64: 128, 128>}, {pipeline_mode = #tpu.pipeline_mode<synchronous>, transform_indices = @transform_2, window_bounds = array<i64: 128, 128>}, {pipeline_mode = #tpu.pipeline_mode<synchronous>, transform_indices = @transform_3, window_bounds = array<i64: 1, 128>}, {pipeline_mode = #tpu.pipeline_mode<synchronous>, transform_indices = @transform_4, window_bounds = array<i64: 128, 128>}, {pipeline_mode = #tpu.pipeline_mode<synchronous>, transform_indices = @transform_5, window_bounds = array<i64: 128, 128>}, {pipeline_mode = #tpu.pipeline_mode<synchronous>, transform_indices = @transform_6, window_bounds = array<i64: 1, 128>}, {pipeline_mode = #tpu.pipeline_mode<synchronous>, transform_indices = @transform_7, window_bounds = array<i64: 128, 128>}, {pipeline_mode = #tpu.pipeline_mode<synchronous>, transform_indices = @transform_8, window_bounds = array<i64: 128, 128>}, {pipeline_mode = #tpu.pipeline_mode<synchronous>, transform_indices = @transform_9, window_bounds = array<i64: 1, 128>}, {pipeline_mode = #tpu.pipeline_mode<synchronous>, transform_indices = @transform_10, window_bounds = array<i64: 128, 128>}]} {
    %c0 = arith.constant 0 : index
    %c0_0 = arith.constant 0 : index
    %0 = vector.load %arg1[%c0, %c0_0] : memref<128x128xf32, #tpu.memory_space<vmem>>, vector<128x128xf32>
    %1 = arith.truncf %0 : vector<128x128xf32> to vector<128x128xbf16>
    %c0_1 = arith.constant 0 : index
    %c0_2 = arith.constant 0 : index
    %2 = vector.load %arg3[%c0_1, %c0_2] : memref<128x128xbf16, #tpu.memory_space<vmem>>, vector<128x128xbf16>
    %cst = arith.constant dense<0.000000e+00> : vector<128x128xf32>
    %3 = tpu.matmul %1, %2, %cst {dimension_numbers = #tpu.dot_dimension_numbers<[1], [0], [0], [1], [0, 0, 1, 1], [], []>} : vector<128x128xbf16>, vector<128x128xbf16>, vector<128x128xf32> -> vector<128x128xf32>
    %c0_3 = arith.constant 0 : index
    %c0_4 = arith.constant 0 : index
    %4 = vector.load %arg2[%c0_3, %c0_4] : memref<128x128xbf16, #tpu.memory_space<vmem>>, vector<128x128xbf16>
    %5 = arith.truncf %3 : vector<128x128xf32> to vector<128x128xbf16>
    %cst_5 = arith.constant dense<0.000000e+00> : vector<128x128xf32>
    %6 = tpu.matmul %4, %5, %cst_5 {dimension_numbers = #tpu.dot_dimension_numbers<[1], [0], [0], [1], [0, 0, 1, 1], [], []>} : vector<128x128xbf16>, vector<128x128xbf16>, vector<128x128xf32> -> vector<128x128xf32>
    %c0_6 = arith.constant 0 : index
    %c0_7 = arith.constant 0 : index
    %7 = vector.load %arg4[%c0_6, %c0_7] : memref<1x128xf32, #tpu.memory_space<vmem>>, vector<1x128xf32>
    %8 = vector.broadcast %7 : vector<1x128xf32> to vector<128x128xf32>
    %9 = arith.addf %6, %8 : vector<128x128xf32>
    %cst_8 = arith.constant 0.000000e+00 : f32
    %10 = vector.broadcast %cst_8 : f32 to vector<128x128xf32>
    %11 = arith.maximumf %9, %10 : vector<128x128xf32>
    %12 = arith.truncf %11 : vector<128x128xf32> to vector<128x128xbf16>
    %c0_9 = arith.constant 0 : index
    %c0_10 = arith.constant 0 : index
    %13 = vector.load %arg6[%c0_9, %c0_10] : memref<128x128xbf16, #tpu.memory_space<vmem>>, vector<128x128xbf16>
    %cst_11 = arith.constant dense<0.000000e+00> : vector<128x128xf32>
    %14 = tpu.matmul %12, %13, %cst_11 {dimension_numbers = #tpu.dot_dimension_numbers<[1], [0], [0], [1], [0, 0, 1, 1], [], []>} : vector<128x128xbf16>, vector<128x128xbf16>, vector<128x128xf32> -> vector<128x128xf32>
    %c0_12 = arith.constant 0 : index
    %c0_13 = arith.constant 0 : index
    %15 = vector.load %arg5[%c0_12, %c0_13] : memref<128x128xbf16, #tpu.memory_space<vmem>>, vector<128x128xbf16>
    %16 = arith.truncf %14 : vector<128x128xf32> to vector<128x128xbf16>
    %cst_14 = arith.constant dense<0.000000e+00> : vector<128x128xf32>
    %17 = tpu.matmul %15, %16, %cst_14 {dimension_numbers = #tpu.dot_dimension_numbers<[1], [0], [0], [1], [0, 0, 1, 1], [], []>} : vector<128x128xbf16>, vector<128x128xbf16>, vector<128x128xf32> -> vector<128x128xf32>
    %c0_15 = arith.constant 0 : index
    %c0_16 = arith.constant 0 : index
    %18 = vector.load %arg7[%c0_15, %c0_16] : memref<1x128xf32, #tpu.memory_space<vmem>>, vector<1x128xf32>
    %19 = vector.broadcast %18 : vector<1x128xf32> to vector<128x128xf32>
    %20 = arith.addf %17, %19 : vector<128x128xf32>
    %cst_17 = arith.constant 5.000000e-01 : f32
    %21 = vector.broadcast %cst_17 : f32 to vector<128x128xf32>
    %22 = arith.mulf %21, %20 : vector<128x128xf32>
    %cst_18 = arith.constant 5.000000e-01 : f32
    %23 = vector.broadcast %cst_18 : f32 to vector<128x128xf32>
    %24 = arith.mulf %23, %9 : vector<128x128xf32>
    %25 = arith.addf %22, %24 : vector<128x128xf32>
    %cst_19 = arith.constant 0.000000e+00 : f32
    %26 = vector.broadcast %cst_19 : f32 to vector<128x128xf32>
    %27 = arith.maximumf %25, %26 : vector<128x128xf32>
    %28 = arith.truncf %27 : vector<128x128xf32> to vector<128x128xbf16>
    %c0_20 = arith.constant 0 : index
    %c0_21 = arith.constant 0 : index
    %29 = vector.load %arg9[%c0_20, %c0_21] : memref<128x128xbf16, #tpu.memory_space<vmem>>, vector<128x128xbf16>
    %cst_22 = arith.constant dense<0.000000e+00> : vector<128x128xf32>
    %30 = tpu.matmul %28, %29, %cst_22 {dimension_numbers = #tpu.dot_dimension_numbers<[1], [0], [0], [1], [0, 0, 1, 1], [], []>} : vector<128x128xbf16>, vector<128x128xbf16>, vector<128x128xf32> -> vector<128x128xf32>
    %c0_23 = arith.constant 0 : index
    %c0_24 = arith.constant 0 : index
    %31 = vector.load %arg8[%c0_23, %c0_24] : memref<128x128xbf16, #tpu.memory_space<vmem>>, vector<128x128xbf16>
    %32 = arith.truncf %30 : vector<128x128xf32> to vector<128x128xbf16>
    %cst_25 = arith.constant dense<0.000000e+00> : vector<128x128xf32>
    %33 = tpu.matmul %31, %32, %cst_25 {dimension_numbers = #tpu.dot_dimension_numbers<[1], [0], [0], [1], [0, 0, 1, 1], [], []>} : vector<128x128xbf16>, vector<128x128xbf16>, vector<128x128xf32> -> vector<128x128xf32>
    %c0_26 = arith.constant 0 : index
    %c0_27 = arith.constant 0 : index
    %34 = vector.load %arg10[%c0_26, %c0_27] : memref<1x128xf32, #tpu.memory_space<vmem>>, vector<1x128xf32>
    %35 = vector.broadcast %34 : vector<1x128xf32> to vector<128x128xf32>
    %36 = arith.addf %33, %35 : vector<128x128xf32>
    %37 = tpu.iota {dimensions = array<i32: 1>} : vector<128x128xi32>
    %c4_i32 = arith.constant 4 : i32
    %38 = vector.broadcast %c4_i32 : i32 to vector<128x128xi32>
    %39 = arith.cmpi slt, %37, %38 : vector<128x128xi32>
    %cst_28 = arith.constant -1.000000e+30 : f32
    %40 = vector.broadcast %cst_28 : f32 to vector<128x128xf32>
    %41 = arith.select %39, %36, %40 : vector<128x128xi1>, vector<128x128xf32>
    %cst_29 = arith.constant dense<0xFF800000> : vector<128xf32>
    %42 = vector.multi_reduction <maximumf>, %41, %cst_29 [1] : vector<128x128xf32> to vector<128xf32>
    %43 = vector.shape_cast %42 : vector<128xf32> to vector<128x1xf32>
    %44 = vector.broadcast %43 : vector<128x1xf32> to vector<128x128xf32>
    %45 = arith.subf %41, %44 : vector<128x128xf32>
    %46 = math.exp %45 : vector<128x128xf32>
    %cst_30 = arith.constant dense<0.000000e+00> : vector<128xf32>
    %47 = vector.multi_reduction <add>, %46, %cst_30 [1] : vector<128x128xf32> to vector<128xf32>
    %48 = vector.shape_cast %47 : vector<128xf32> to vector<128x1xf32>
    %49 = math.log %48 : vector<128x1xf32>
    %50 = vector.broadcast %49 : vector<128x1xf32> to vector<128x128xf32>
    %51 = arith.subf %45, %50 : vector<128x128xf32>
    %c0_31 = arith.constant 0 : index
    %c0_32 = arith.constant 0 : index
    %52 = vector.load %arg11[%c0_31, %c0_32] : memref<128x128xf32, #tpu.memory_space<vmem>>, vector<128x128xf32>
    tpu.vector_store %arg11[%c0_31, %c0_32], %51 {strides = array<i32>} : memref<128x128xf32, #tpu.memory_space<vmem>>, vector<128x128xf32>,
    return
  }
  func.func @transform_0(%arg0: i32) -> (i32, i32) {
    %c0_i32 = arith.constant 0 : i32
    %c0_i32_0 = arith.constant 0 : i32
    %c0_i32_1 = arith.constant 0 : i32
    return %c0_i32, %c0_i32_0 : i32, i32
  }
  func.func @transform_1(%arg0: i32) -> (i32, i32) {
    %c0_i32 = arith.constant 0 : i32
    %c0_i32_0 = arith.constant 0 : i32
    %c0_i32_1 = arith.constant 0 : i32
    return %c0_i32, %c0_i32_0 : i32, i32
  }
  func.func @transform_2(%arg0: i32) -> (i32, i32) {
    %c0_i32 = arith.constant 0 : i32
    %c0_i32_0 = arith.constant 0 : i32
    %c0_i32_1 = arith.constant 0 : i32
    return %c0_i32, %c0_i32_0 : i32, i32
  }
  func.func @transform_3(%arg0: i32) -> (i32, i32) {
    %c0_i32 = arith.constant 0 : i32
    %c0_i32_0 = arith.constant 0 : i32
    %c0_i32_1 = arith.constant 0 : i32
    return %c0_i32, %c0_i32_0 : i32, i32
  }
  func.func @transform_4(%arg0: i32) -> (i32, i32) {
    %c0_i32 = arith.constant 0 : i32
    %c0_i32_0 = arith.constant 0 : i32
    %c0_i32_1 = arith.constant 0 : i32
    return %c0_i32, %c0_i32_0 : i32, i32
  }
  func.func @transform_5(%arg0: i32) -> (i32, i32) {
    %c0_i32 = arith.constant 0 : i32
    %c0_i32_0 = arith.constant 0 : i32
    %c0_i32_1 = arith.constant 0 : i32
    return %c0_i32, %c0_i32_0 : i32, i32
  }
  func.func @transform_6(%arg0: i32) -> (i32, i32) {
    %c0_i32 = arith.constant 0 : i32
    %c0_i32_0 = arith.constant 0 : i32
    %c0_i32_1 = arith.constant 0 : i32
    return %c0_i32, %c0_i32_0 : i32, i32
  }
  func.func @transform_7(%arg0: i32) -> (i32, i32) {
    %c0_i32 = arith.constant 0 : i32
    %c0_i32_0 = arith.constant 0 : i32
    %c0_i32_1 = arith.constant 0 : i32
    return %c0_i32, %c0_i32_0 : i32, i32
  }
  func.func @transform_8(%arg0: i32) -> (i32, i32) {
    %c0_i32 = arith.constant 0 : i32
    %c0_i32_0 = arith.constant 0 : i32
    %c0_i32_1 = arith.constant 0 : i32
    return %c0_i32, %c0_i32_0 : i32, i32
  }
  func.func @transform_9(%arg0: i32) -> (i32, i32) {
    %c0_i32 = arith.constant 0 : i32
    %c0_i32_0 = arith.constant 0 : i32
    %c0_i32_1 = arith.constant 0 : i32
    return %c0_i32, %c0_i32_0 : i32, i32
  }
  func.func @transform_10(%arg0: i32) -> (i32, i32) {
    %c0_i32 = arith.constant 0 : i32
    %c0_i32_0 = arith.constant 0 : i32
    %c0_i32_1 = arith.constant 0 : i32
    return %c0_i32, %c0_i32_0 : i32, i32
  }
}

</mosaic_0001>

<llo_original>
// kernel: markov_gcnr_forward.1
$region0: #{markov_gcnr_forward.1}
  #allocation0 [shape = 'u32[]', space=smem, size = 0x4, offset = 0x4, fixed_abs, tag = 'smem constant byte address 0x4 - core index']
  #allocation1 [shape = 'u32[144,128]{1,0:T(1,128)}', space=vmem, size = 0x12000, scoped, tag = 'internal scratch']
  %s0 = inlined_call_operand.vmem [shape: f32[128,128], index: 0, kind: input, shape index: {}]
  %s1 = inlined_call_operand.vmem [shape: bf16[128,128], index: 1, kind: input, shape index: {}]
  %s2 = inlined_call_operand.vmem [shape: bf16[128,128], index: 2, kind: input, shape index: {}]
  %s3 = inlined_call_operand.vmem [shape: f32[1,128], index: 3, kind: input, shape index: {}]
  %s4 = inlined_call_operand.vmem [shape: bf16[128,128], index: 4, kind: input, shape index: {}]
  %s5 = inlined_call_operand.vmem [shape: bf16[128,128], index: 5, kind: input, shape index: {}]
  %s6 = inlined_call_operand.vmem [shape: f32[1,128], index: 6, kind: input, shape index: {}]
  %s7 = inlined_call_operand.vmem [shape: bf16[128,128], index: 7, kind: input, shape index: {}]
  %s8 = inlined_call_operand.vmem [shape: bf16[128,128], index: 8, kind: input, shape index: {}]
  %s9 = inlined_call_operand.vmem [shape: f32[1,128], index: 9, kind: input, shape index: {}]
  %s10 = inlined_call_operand.vmem [shape: f32[128,128], index: 10, kind: output, shape index: {}]
  %s11 = sld [smem:[#allocation0]]
  $region50: #{markov_gcnr_forward.1} parent=0
    _
  %s13 = ssub.s32 1, %s11
  %s14 = scalar_select 0, %s13, %s11
  // Predicated region
  $region2: #{markov_gcnr_forward.1} parent=0 // pred_check
    _
  $region3: #{markov_gcnr_forward.1} parent=0 // pred_check_branch
    %16 = sbr.rel (0) target = $region5
  $region4: #{markov_gcnr_forward.1} parent=0 // pred_region
    _
  $region5: #{markov_gcnr_forward.1} parent=0 // pred_fallthru
    _
  // Predicated region
  $region6: #{markov_gcnr_forward.1} parent=0 // pred_check
    _
  $region7: #{markov_gcnr_forward.1} parent=0 // pred_check_branch
    %18 = sbr.rel (0) target = $region9
  $region8: #{markov_gcnr_forward.1} parent=0 // pred_region
    _
  $region9: #{markov_gcnr_forward.1} parent=0 // pred_fallthru
    _
  // Predicated region
  $region10: #{markov_gcnr_forward.1} parent=0 // pred_check
    _
  $region11: #{markov_gcnr_forward.1} parent=0 // pred_check_branch
    %20 = sbr.rel (0) target = $region13
  $region12: #{markov_gcnr_forward.1} parent=0 // pred_region
    _
  $region13: #{markov_gcnr_forward.1} parent=0 // pred_fallthru
    _
  // Predicated region
  $region14: #{markov_gcnr_forward.1} parent=0 // pred_check
    _
  $region15: #{markov_gcnr_forward.1} parent=0 // pred_check_branch
    %22 = sbr.rel (0) target = $region17
  $region16: #{markov_gcnr_forward.1} parent=0 // pred_region
    _
  $region17: #{markov_gcnr_forward.1} parent=0 // pred_fallthru
    _
  // Predicated region
  $region18: #{markov_gcnr_forward.1} parent=0 // pred_check
    _
  $region19: #{markov_gcnr_forward.1} parent=0 // pred_check_branch
    %24 = sbr.rel (0) target = $region21
  $region20: #{markov_gcnr_forward.1} parent=0 // pred_region
    _
  $region21: #{markov_gcnr_forward.1} parent=0 // pred_fallthru
    _
  // Predicated region
  $region22: #{markov_gcnr_forward.1} parent=0 // pred_check
    _
  $region23: #{markov_gcnr_forward.1} parent=0 // pred_check_branch
    %26 = sbr.rel (0) target = $region25
  $region24: #{markov_gcnr_forward.1} parent=0 // pred_region
    _
  $region25: #{markov_gcnr_forward.1} parent=0 // pred_fallthru
    _
  // Predicated region
  $region26: #{markov_gcnr_forward.1} parent=0 // pred_check
    _
  $region27: #{markov_gcnr_forward.1} parent=0 // pred_check_branch
    %28 = sbr.rel (0) target = $region29
  $region28: #{markov_gcnr_forward.1} parent=0 // pred_region
    _
  $region29: #{markov_gcnr_forward.1} parent=0 // pred_fallthru
    _
  // Predicated region
  $region30: #{markov_gcnr_forward.1} parent=0 // pred_check
    _
  $region31: #{markov_gcnr_forward.1} parent=0 // pred_check_branch
    %30 = sbr.rel (0) target = $region33
  $region32: #{markov_gcnr_forward.1} parent=0 // pred_region
    _
  $region33: #{markov_gcnr_forward.1} parent=0 // pred_fallthru
    _
  // Predicated region
  $region34: #{markov_gcnr_forward.1} parent=0 // pred_check
    _
  $region35: #{markov_gcnr_forward.1} parent=0 // pred_check_branch
    %32 = sbr.rel (0) target = $region37
  $region36: #{markov_gcnr_forward.1} parent=0 // pred_region
    _
  $region37: #{markov_gcnr_forward.1} parent=0 // pred_fallthru
    _
  // Predicated region
  $region38: #{markov_gcnr_forward.1} parent=0 // pred_check
    _
  $region39: #{markov_gcnr_forward.1} parent=0 // pred_check_branch
    %34 = sbr.rel (0) target = $region41
  $region40: #{markov_gcnr_forward.1} parent=0 // pred_region
    _
  $region41: #{markov_gcnr_forward.1} parent=0 // pred_fallthru
    _
  %v36 = vld [vmem:[%s0] sm:$0xff]
  %v37 = vld [vmem:[%s0 + $0x8] sm:$0xff]
  %v38 = vld [vmem:[%s0 + $0x10] sm:$0xff]
  %v39 = vld [vmem:[%s0 + $0x18] sm:$0xff]
  %v40 = vld [vmem:[%s0 + $0x20] sm:$0xff]
  %v41 = vld [vmem:[%s0 + $0x28] sm:$0xff]
  %v42 = vld [vmem:[%s0 + $0x30] sm:$0xff]
  %v43 = vld [vmem:[%s0 + $0x38] sm:$0xff]
  %v44 = vld [vmem:[%s0 + $0x40] sm:$0xff]
  %v45 = vld [vmem:[%s0 + $0x48] sm:$0xff]
  %v46 = vld [vmem:[%s0 + $0x50] sm:$0xff]
  %v47 = vld [vmem:[%s0 + $0x58] sm:$0xff]
  %v48 = vld [vmem:[%s0 + $0x60] sm:$0xff]
  %v49 = vld [vmem:[%s0 + $0x68] sm:$0xff]
  %v50 = vld [vmem:[%s0 + $0x70] sm:$0xff]
  %v51 = vld [vmem:[%s0 + $0x78] sm:$0xff]
  %v52 = vpack.c.bf16 %v37, %v36
  %v53 = vpack.c.bf16 %v39, %v38
  %v54 = vpack.c.bf16 %v41, %v40
  %v55 = vpack.c.bf16 %v43, %v42
  %v56 = vpack.c.bf16 %v45, %v44
  %v57 = vpack.c.bf16 %v47, %v46
  %v58 = vpack.c.bf16 %v49, %v48
  %v59 = vpack.c.bf16 %v51, %v50
  %v60 = vld [vmem:[%s2] sm:$0xf]
  %v61 = vld [vmem:[%s2 + $0x4] sm:$0xf]
  %v62 = vld [vmem:[%s2 + $0x8] sm:$0xf]
  %v63 = vld [vmem:[%s2 + $0xc] sm:$0xf]
  %v64 = vld [vmem:[%s2 + $0x10] sm:$0xf]
  %v65 = vld [vmem:[%s2 + $0x14] sm:$0xf]
  %v66 = vld [vmem:[%s2 + $0x18] sm:$0xf]
  %v67 = vld [vmem:[%s2 + $0x1c] sm:$0xf]
  %v68 = vld [vmem:[%s2 + $0x20] sm:$0xf]
  %v69 = vld [vmem:[%s2 + $0x24] sm:$0xf]
  %v70 = vld [vmem:[%s2 + $0x28] sm:$0xf]
  %v71 = vld [vmem:[%s2 + $0x2c] sm:$0xf]
  %v72 = vld [vmem:[%s2 + $0x30] sm:$0xf]
  %v73 = vld [vmem:[%s2 + $0x34] sm:$0xf]
  %v74 = vld [vmem:[%s2 + $0x38] sm:$0xf]
  %v75 = vld [vmem:[%s2 + $0x3c] sm:$0xf]
  %v92 = vunpack.c.l.b16 %v60
  %v93 = vunpack.c.l.b16 %v61
  %v94 = vunpack.c.l.b16 %v62
  %v95 = vunpack.c.l.b16 %v63
  %v96 = vunpack.c.l.b16 %v64
  %v97 = vunpack.c.l.b16 %v65
  %v98 = vunpack.c.l.b16 %v66
  %v99 = vunpack.c.l.b16 %v67
  %v100 = vunpack.c.l.b16 %v68
  %v101 = vunpack.c.l.b16 %v69
  %v102 = vunpack.c.l.b16 %v70
  %v103 = vunpack.c.l.b16 %v71
  %v104 = vunpack.c.l.b16 %v72
  %v105 = vunpack.c.l.b16 %v73
  %v106 = vunpack.c.l.b16 %v74
  %v107 = vunpack.c.l.b16 %v75
  %v108 = vpack.c.b16 %v93, %v92
  %v109 = vpack.c.b16 %v95, %v94
  %v110 = vpack.c.b16 %v97, %v96
  %v111 = vpack.c.b16 %v99, %v98
  %v112 = vpack.c.b16 %v101, %v100
  %v113 = vpack.c.b16 %v103, %v102
  %v114 = vpack.c.b16 %v105, %v104
  %v115 = vpack.c.b16 %v107, %v106
  %124 = vmatprep.subr.bf16.mxu0 0
  %125 = vmatpush1.bf16.msra.mxu0 %v108
  %126 = vmatprep.subr.bf16.mxu0 0
  %127 = vmatpush1.bf16.msra.mxu0 %v109
  %128 = vmatprep.subr.bf16.mxu0 0
  %129 = vmatpush1.bf16.msra.mxu0 %v110
  %130 = vmatprep.subr.bf16.mxu0 0
  %131 = vmatpush1.bf16.msra.mxu0 %v111
  %132 = vmatprep.subr.bf16.mxu0 0
  %133 = vmatpush1.bf16.msra.mxu0 %v112
  %134 = vmatprep.subr.bf16.mxu0 0
  %135 = vmatpush1.bf16.msra.mxu0 %v113
  %136 = vmatprep.subr.bf16.mxu0 0
  %137 = vmatpush1.bf16.msra.mxu0 %v114
  %138 = vmatprep.subr.bf16.mxu0 0
  %139 = vmatpush1.bf16.msra.mxu0 %v115
  %140 = vmatprep.subr.bf16.mxu0 0
  %141 = vmatpush1.bf16.msra.mxu0 0
  %142 = vmatprep.subr.bf16.mxu0 0
  %143 = vmatpush1.bf16.msra.mxu0 0
  %144 = vmatprep.subr.bf16.mxu0 0
  %145 = vmatpush1.bf16.msra.mxu0 0
  %146 = vmatprep.subr.bf16.mxu0 0
  %147 = vmatpush1.bf16.msra.mxu0 0
  %148 = vmatprep.subr.bf16.mxu0 0
  %149 = vmatpush1.bf16.msra.mxu0 0
  %150 = vmatprep.subr.bf16.mxu0 0
  %151 = vmatpush1.bf16.msra.mxu0 0
  %152 = vmatprep.subr.bf16.mxu0 0
  %153 = vmatpush1.bf16.msra.mxu0 0
  %154 = vmatprep.subr.bf16.mxu0 0
  %155 = vmatpush1.bf16.msra.mxu0 0
  %156 = vmatprep.mubr.bf16.mxu0 0
  %157 = vmatmul.mubr.bf16.gmra.mrb[0].mxu0 %v52
  %v158 = vpop.f32.mrb[0].mxu0
  %v159 = vadd.f32 0.0, %v158
  %v160 = vpop.f32.mrb[0].mxu0
  %v161 = vpop.f32.mrb[0].mxu0
  %v162 = vadd.f32 0.0, %v161
  %v163 = vpop.f32.mrb[0].mxu0
  %164 = vmatprep.mubr.bf16.mxu0 0
  %165 = vmatmul.mubr.bf16.gmra.mrb[0].mxu0 %v53
  %v166 = vpop.f32.mrb[0].mxu0
  %v167 = vadd.f32 0.0, %v166
  %v168 = vpop.f32.mrb[0].mxu0
  %v169 = vpop.f32.mrb[0].mxu0
  %v170 = vadd.f32 0.0, %v169
  %v171 = vpop.f32.mrb[0].mxu0
  %172 = vmatprep.mubr.bf16.mxu0 0
  %173 = vmatmul.mubr.bf16.gmra.mrb[0].mxu0 %v54
  %v174 = vpop.f32.mrb[0].mxu0
  %v175 = vadd.f32 0.0, %v174
  %v176 = vpop.f32.mrb[0].mxu0
  %v177 = vpop.f32.mrb[0].mxu0
  %v178 = vadd.f32 0.0, %v177
  %v179 = vpop.f32.mrb[0].mxu0
  %180 = vmatprep.mubr.bf16.mxu0 0
  %181 = vmatmul.mubr.bf16.gmra.mrb[0].mxu0 %v55
  %v182 = vpop.f32.mrb[0].mxu0
  %v183 = vadd.f32 0.0, %v182
  %v184 = vpop.f32.mrb[0].mxu0
  %v185 = vpop.f32.mrb[0].mxu0
  %v186 = vadd.f32 0.0, %v185
  %v187 = vpop.f32.mrb[0].mxu0
  %188 = vmatprep.mubr.bf16.mxu0 0
  %189 = vmatmul.mubr.bf16.gmra.mrb[0].mxu0 %v56
  %v190 = vpop.f32.mrb[0].mxu0
  %v191 = vadd.f32 0.0, %v190
  %v192 = vpop.f32.mrb[0].mxu0
  %v193 = vpop.f32.mrb[0].mxu0
  %v194 = vadd.f32 0.0, %v193
  %v195 = vpop.f32.mrb[0].mxu0
  %196 = vmatprep.mubr.bf16.mxu0 0
  %197 = vmatmul.mubr.bf16.gmra.mrb[0].mxu0 %v57
  %v198 = vpop.f32.mrb[0].mxu0
  %v199 = vadd.f32 0.0, %v198
  %v200 = vpop.f32.mrb[0].mxu0
  %v201 = vpop.f32.mrb[0].mxu0
  %v202 = vadd.f32 0.0, %v201
  %v203 = vpop.f32.mrb[0].mxu0
  %204 = vmatprep.mubr.bf16.mxu0 0
  %205 = vmatmul.mubr.bf16.gmra.mrb[0].mxu0 %v58
  %v206 = vpop.f32.mrb[0].mxu0
  %v207 = vadd.f32 0.0, %v206
  %v208 = vpop.f32.mrb[0].mxu0
  %v209 = vpop.f32.mrb[0].mxu0
  %v210 = vadd.f32 0.0, %v209
  %v211 = vpop.f32.mrb[0].mxu0
  %212 = vmatprep.mubr.bf16.mxu0 0
  %213 = vmatmul.mubr.bf16.gmra.mrb[0].mxu0 %v59
  %v214 = vpop.f32.mrb[0].mxu0
  %v215 = vadd.f32 0.0, %v214
  %v216 = vpop.f32.mrb[0].mxu0
  %v217 = vpop.f32.mrb[0].mxu0
  %v218 = vadd.f32 0.0, %v217
  %v219 = vpop.f32.mrb[0].mxu0
  %220 = vdwg.mxu0
  %v221 = vld [vmem:[%s1] sm:$0xf]
  %v222 = vld [vmem:[%s1 + $0x4] sm:$0xf]
  %v223 = vld [vmem:[%s1 + $0x8] sm:$0xf]
  %v224 = vld [vmem:[%s1 + $0xc] sm:$0xf]
  %v225 = vld [vmem:[%s1 + $0x10] sm:$0xf]
  %v226 = vld [vmem:[%s1 + $0x14] sm:$0xf]
  %v227 = vld [vmem:[%s1 + $0x18] sm:$0xf]
  %v228 = vld [vmem:[%s1 + $0x1c] sm:$0xf]
  %v229 = vld [vmem:[%s1 + $0x20] sm:$0xf]
  %v230 = vld [vmem:[%s1 + $0x24] sm:$0xf]
  %v231 = vld [vmem:[%s1 + $0x28] sm:$0xf]
  %v232 = vld [vmem:[%s1 + $0x2c] sm:$0xf]
  %v233 = vld [vmem:[%s1 + $0x30] sm:$0xf]
  %v234 = vld [vmem:[%s1 + $0x34] sm:$0xf]
  %v235 = vld [vmem:[%s1 + $0x38] sm:$0xf]
  %v236 = vld [vmem:[%s1 + $0x3c] sm:$0xf]
  %v237 = vpack.c.bf16 %v162, %v159
  %v238 = vpack.c.bf16 %v170, %v167
  %v239 = vpack.c.bf16 %v178, %v175
  %v240 = vpack.c.bf16 %v186, %v183
  %v241 = vpack.c.bf16 %v194, %v191
  %v242 = vpack.c.bf16 %v202, %v199
  %v243 = vpack.c.bf16 %v210, %v207
  %v244 = vpack.c.bf16 %v218, %v215
  %v245 = vld [vmem:[%s3] sm:$0x1]
  %v247 = vlaneseq
  %v248 = vshrl.u32 %v247, 7
  %v249 = vsub.s32 0, %v248
  %v250 = vrot.slane %v245, %v249
  %v268 = vunpack.c.l.b16 %v221
  %v269 = vunpack.c.l.b16 %v222
  %v270 = vunpack.c.l.b16 %v223
  %v271 = vunpack.c.l.b16 %v224
  %v272 = vunpack.c.l.b16 %v225
  %v273 = vunpack.c.l.b16 %v226
  %v274 = vunpack.c.l.b16 %v227
  %v275 = vunpack.c.l.b16 %v228
  %v276 = vunpack.c.l.b16 %v229
  %v277 = vunpack.c.l.b16 %v230
  %v278 = vunpack.c.l.b16 %v231
  %v279 = vunpack.c.l.b16 %v232
  %v280 = vunpack.c.l.b16 %v233
  %v281 = vunpack.c.l.b16 %v234
  %v282 = vunpack.c.l.b16 %v235
  %v283 = vunpack.c.l.b16 %v236
  %v284 = vpack.c.b16 %v269, %v268
  %v285 = vpack.c.b16 %v271, %v270
  %v286 = vpack.c.b16 %v273, %v272
  %v287 = vpack.c.b16 %v275, %v274
  %v288 = vpack.c.b16 %v277, %v276
  %v289 = vpack.c.b16 %v279, %v278
  %v290 = vpack.c.b16 %v281, %v280
  %v291 = vpack.c.b16 %v283, %v282
  %300 = vmatprep.subr.bf16.mxu0 0
  %301 = vmatpush1.bf16.msra.mxu0 %v237
  %302 = vmatprep.subr.bf16.mxu0 0
  %303 = vmatpush1.bf16.msra.mxu0 %v238
  %304 = vmatprep.subr.bf16.mxu0 0
  %305 = vmatpush1.bf16.msra.mxu0 %v239
  %306 = vmatprep.subr.bf16.mxu0 0
  %307 = vmatpush1.bf16.msra.mxu0 %v240
  %308 = vmatprep.subr.bf16.mxu0 0
  %309 = vmatpush1.bf16.msra.mxu0 %v241
  %310 = vmatprep.subr.bf16.mxu0 0
  %311 = vmatpush1.bf16.msra.mxu0 %v242
  %312 = vmatprep.subr.bf16.mxu0 0
  %313 = vmatpush1.bf16.msra.mxu0 %v243
  %314 = vmatprep.subr.bf16.mxu0 0
  %315 = vmatpush1.bf16.msra.mxu0 %v244
  %316 = vmatprep.subr.bf16.mxu0 0
  %317 = vmatpush1.bf16.msra.mxu0 0
  %318 = vmatprep.subr.bf16.mxu0 0
  %319 = vmatpush1.bf16.msra.mxu0 0
  %320 = vmatprep.subr.bf16.mxu0 0
  %321 = vmatpush1.bf16.msra.mxu0 0
  %322 = vmatprep.subr.bf16.mxu0 0
  %323 = vmatpush1.bf16.msra.mxu0 0
  %324 = vmatprep.subr.bf16.mxu0 0
  %325 = vmatpush1.bf16.msra.mxu0 0
  %326 = vmatprep.subr.bf16.mxu0 0
  %327 = vmatpush1.bf16.msra.mxu0 0
  %328 = vmatprep.subr.bf16.mxu0 0
  %329 = vmatpush1.bf16.msra.mxu0 0
  %330 = vmatprep.subr.bf16.mxu0 0
  %331 = vmatpush1.bf16.msra.mxu0 0
  %332 = vmatprep.mubr.bf16.mxu0 0
  %333 = vmatmul.mubr.bf16.gmra.mrb[0].mxu0 %v284
  %v334 = vpop.f32.mrb[0].mxu0
  %v335 = vadd.f32 %v250, %v334
  %v336 = vpop.f32.mrb[0].mxu0
  %v337 = vpop.f32.mrb[0].mxu0
  %v338 = vadd.f32 %v250, %v337
  %v339 = vpop.f32.mrb[0].mxu0
  %340 = vmatprep.mubr.bf16.mxu0 0
  %341 = vmatmul.mubr.bf16.gmra.mrb[0].mxu0 %v285
  %v342 = vpop.f32.mrb[0].mxu0
  %v343 = vadd.f32 %v250, %v342
  %v344 = vpop.f32.mrb[0].mxu0
  %v345 = vpop.f32.mrb[0].mxu0
  %v346 = vadd.f32 %v250, %v345
  %v347 = vpop.f32.mrb[0].mxu0
  %348 = vmatprep.mubr.bf16.mxu0 0
  %349 = vmatmul.mubr.bf16.gmra.mrb[0].mxu0 %v286
  %v350 = vpop.f32.mrb[0].mxu0
  %v351 = vadd.f32 %v250, %v350
  %v352 = vpop.f32.mrb[0].mxu0
  %v353 = vpop.f32.mrb[0].mxu0
  %v354 = vadd.f32 %v250, %v353
  %v355 = vpop.f32.mrb[0].mxu0
  %356 = vmatprep.mubr.bf16.mxu0 0
  %357 = vmatmul.mubr.bf16.gmra.mrb[0].mxu0 %v287
  %v358 = vpop.f32.mrb[0].mxu0
  %v359 = vadd.f32 %v250, %v358
  %v360 = vpop.f32.mrb[0].mxu0
  %v361 = vpop.f32.mrb[0].mxu0
  %v362 = vadd.f32 %v250, %v361
  %v363 = vpop.f32.mrb[0].mxu0
  %364 = vmatprep.mubr.bf16.mxu0 0
  %365 = vmatmul.mubr.bf16.gmra.mrb[0].mxu0 %v288
  %v366 = vpop.f32.mrb[0].mxu0
  %v367 = vadd.f32 %v250, %v366
  %v368 = vpop.f32.mrb[0].mxu0
  %v369 = vpop.f32.mrb[0].mxu0
  %v370 = vadd.f32 %v250, %v369
  %v371 = vpop.f32.mrb[0].mxu0
  %372 = vmatprep.mubr.bf16.mxu0 0
  %373 = vmatmul.mubr.bf16.gmra.mrb[0].mxu0 %v289
  %v374 = vpop.f32.mrb[0].mxu0
  %v375 = vadd.f32 %v250, %v374
  %v376 = vpop.f32.mrb[0].mxu0
  %v377 = vpop.f32.mrb[0].mxu0
  %v378 = vadd.f32 %v250, %v377
  %v379 = vpop.f32.mrb[0].mxu0
  %380 = vmatprep.mubr.bf16.mxu0 0
  %381 = vmatmul.mubr.bf16.gmra.mrb[0].mxu0 %v290
  %v382 = vpop.f32.mrb[0].mxu0
  %v383 = vadd.f32 %v250, %v382
  %v384 = vpop.f32.mrb[0].mxu0
  %v385 = vpop.f32.mrb[0].mxu0
  %v386 = vadd.f32 %v250, %v385
  %v387 = vpop.f32.mrb[0].mxu0
  %388 = vmatprep.mubr.bf16.mxu0 0
  %389 = vmatmul.mubr.bf16.gmra.mrb[0].mxu0 %v291
  %v390 = vpop.f32.mrb[0].mxu0
  %v391 = vadd.f32 %v250, %v390
  %v392 = vpop.f32.mrb[0].mxu0
  %v393 = vpop.f32.mrb[0].mxu0
  %v394 = vadd.f32 %v250, %v393
  %v395 = vpop.f32.mrb[0].mxu0
  %396 = vdwg.mxu0
  %v397 = vmax.f32 %v335, 0.0
  %v398 = vmax.f32 %v338, 0.0
  %v399 = vmax.f32 %v343, 0.0
  %v400 = vmax.f32 %v346, 0.0
  %v401 = vmax.f32 %v351, 0.0
  %v402 = vmax.f32 %v354, 0.0
  %v403 = vmax.f32 %v359, 0.0
  %v404 = vmax.f32 %v362, 0.0
  %v405 = vmax.f32 %v367, 0.0
  %v406 = vmax.f32 %v370, 0.0
  %v407 = vmax.f32 %v375, 0.0
  %v408 = vmax.f32 %v378, 0.0
  %v409 = vmax.f32 %v383, 0.0
  %v410 = vmax.f32 %v386, 0.0
  %v411 = vmax.f32 %v391, 0.0
  %v412 = vmax.f32 %v394, 0.0
  %v413 = vpack.c.bf16 %v398, %v397
  %v414 = vpack.c.bf16 %v400, %v399
  %v415 = vpack.c.bf16 %v402, %v401
  %v416 = vpack.c.bf16 %v404, %v403
  %v417 = vpack.c.bf16 %v406, %v405
  %v418 = vpack.c.bf16 %v408, %v407
  %v419 = vpack.c.bf16 %v410, %v409
  %v420 = vpack.c.bf16 %v412, %v411
  %v421 = vld [vmem:[%s5] sm:$0xf]
  %v422 = vld [vmem:[%s5 + $0x4] sm:$0xf]
  %v423 = vld [vmem:[%s5 + $0x8] sm:$0xf]
  %v424 = vld [vmem:[%s5 + $0xc] sm:$0xf]
  %v425 = vld [vmem:[%s5 + $0x10] sm:$0xf]
  %v426 = vld [vmem:[%s5 + $0x14] sm:$0xf]
  %v427 = vld [vmem:[%s5 + $0x18] sm:$0xf]
  %v428 = vld [vmem:[%s5 + $0x1c] sm:$0xf]
  %v429 = vld [vmem:[%s5 + $0x20] sm:$0xf]
  %v430 = vld [vmem:[%s5 + $0x24] sm:$0xf]
  %v431 = vld [vmem:[%s5 + $0x28] sm:$0xf]
  %v432 = vld [vmem:[%s5 + $0x2c] sm:$0xf]
  %v433 = vld [vmem:[%s5 + $0x30] sm:$0xf]
  %v434 = vld [vmem:[%s5 + $0x34] sm:$0xf]
  %v435 = vld [vmem:[%s5 + $0x38] sm:$0xf]
  %v436 = vld [vmem:[%s5 + $0x3c] sm:$0xf]
  %v453 = vunpack.c.l.b16 %v421
  %v454 = vunpack.c.l.b16 %v422
  %v455 = vunpack.c.l.b16 %v423
  %v456 = vunpack.c.l.b16 %v424
  %v457 = vunpack.c.l.b16 %v425
  %v458 = vunpack.c.l.b16 %v426
  %v459 = vunpack.c.l.b16 %v427
  %v460 = vunpack.c.l.b16 %v428
  %v461 = vunpack.c.l.b16 %v429
  %v462 = vunpack.c.l.b16 %v430
  %v463 = vunpack.c.l.b16 %v431
  %v464 = vunpack.c.l.b16 %v432
  %v465 = vunpack.c.l.b16 %v433
  %v466 = vunpack.c.l.b16 %v434
  %v467 = vunpack.c.l.b16 %v435
  %v468 = vunpack.c.l.b16 %v436
  %v469 = vpack.c.b16 %v454, %v453
  %v470 = vpack.c.b16 %v456, %v455
  %v471 = vpack.c.b16 %v458, %v457
  %v472 = vpack.c.b16 %v460, %v459
  %v473 = vpack.c.b16 %v462, %v461
  %v474 = vpack.c.b16 %v464, %v463
  %v475 = vpack.c.b16 %v466, %v465
  %v476 = vpack.c.b16 %v468, %v467
  %485 = vmatprep.subr.bf16.mxu0 0
  %486 = vmatpush1.bf16.msra.mxu0 %v469
  %487 = vmatprep.subr.bf16.mxu0 0
  %488 = vmatpush1.bf16.msra.mxu0 %v470
  %489 = vmatprep.subr.bf16.mxu0 0
  %490 = vmatpush1.bf16.msra.mxu0 %v471
  %491 = vmatprep.subr.bf16.mxu0 0
  %492 = vmatpush1.bf16.msra.mxu0 %v472
  %493 = vmatprep.subr.bf16.mxu0 0
  %494 = vmatpush1.bf16.msra.mxu0 %v473
  %495 = vmatprep.subr.bf16.mxu0 0
  %496 = vmatpush1.bf16.msra.mxu0 %v474
  %497 = vmatprep.subr.bf16.mxu0 0
  %498 = vmatpush1.bf16.msra.mxu0 %v475
  %499 = vmatprep.subr.bf16.mxu0 0
  %500 = vmatpush1.bf16.msra.mxu0 %v476
  %501 = vmatprep.subr.bf16.mxu0 0
  %502 = vmatpush1.bf16.msra.mxu0 0
  %503 = vmatprep.subr.bf16.mxu0 0
  %504 = vmatpush1.bf16.msra.mxu0 0
  %505 = vmatprep.subr.bf16.mxu0 0
  %506 = vmatpush1.bf16.msra.mxu0 0
  %507 = vmatprep.subr.bf16.mxu0 0
  %508 = vmatpush1.bf16.msra.mxu0 0
  %509 = vmatprep.subr.bf16.mxu0 0
  %510 = vmatpush1.bf16.msra.mxu0 0
  %511 = vmatprep.subr.bf16.mxu0 0
  %512 = vmatpush1.bf16.msra.mxu0 0
  %513 = vmatprep.subr.bf16.mxu0 0
  %514 = vmatpush1.bf16.msra.mxu0 0
  %515 = vmatprep.subr.bf16.mxu0 0
  %516 = vmatpush1.bf16.msra.mxu0 0
  %517 = vmatprep.mubr.bf16.mxu0 0
  %518 = vmatmul.mubr.bf16.gmra.mrb[0].mxu0 %v413
  %v519 = vpop.f32.mrb[0].mxu0
  %v520 = vadd.f32 0.0, %v519
  %v521 = vpop.f32.mrb[0].mxu0
  %v522 = vpop.f32.mrb[0].mxu0
  %v523 = vadd.f32 0.0, %v522
  %v524 = vpop.f32.mrb[0].mxu0
  %525 = vmatprep.mubr.bf16.mxu0 0
  %526 = vmatmul.mubr.bf16.gmra.mrb[0].mxu0 %v414
  %v527 = vpop.f32.mrb[0].mxu0
  %v528 = vadd.f32 0.0, %v527
  %v529 = vpop.f32.mrb[0].mxu0
  %v530 = vpop.f32.mrb[0].mxu0
  %v531 = vadd.f32 0.0, %v530
  %v532 = vpop.f32.mrb[0].mxu0
  %533 = vmatprep.mubr.bf16.mxu0 0
  %534 = vmatmul.mubr.bf16.gmra.mrb[0].mxu0 %v415
  %v535 = vpop.f32.mrb[0].mxu0
  %v536 = vadd.f32 0.0, %v535
  %v537 = vpop.f32.mrb[0].mxu0
  %v538 = vpop.f32.mrb[0].mxu0
  %v539 = vadd.f32 0.0, %v538
  %v540 = vpop.f32.mrb[0].mxu0
  %541 = vmatprep.mubr.bf16.mxu0 0
  %542 = vmatmul.mubr.bf16.gmra.mrb[0].mxu0 %v416
  %v543 = vpop.f32.mrb[0].mxu0
  %v544 = vadd.f32 0.0, %v543
  %v545 = vpop.f32.mrb[0].mxu0
  %v546 = vpop.f32.mrb[0].mxu0
  %v547 = vadd.f32 0.0, %v546
  %v548 = vpop.f32.mrb[0].mxu0
  %549 = vmatprep.mubr.bf16.mxu0 0
  %550 = vmatmul.mubr.bf16.gmra.mrb[0].mxu0 %v417
  %v551 = vpop.f32.mrb[0].mxu0
  %v552 = vadd.f32 0.0, %v551
  %v553 = vpop.f32.mrb[0].mxu0
  %v554 = vpop.f32.mrb[0].mxu0
  %v555 = vadd.f32 0.0, %v554
  %v556 = vpop.f32.mrb[0].mxu0
  %557 = vmatprep.mubr.bf16.mxu0 0
  %558 = vmatmul.mubr.bf16.gmra.mrb[0].mxu0 %v418
  %v559 = vpop.f32.mrb[0].mxu0
  %v560 = vadd.f32 0.0, %v559
  %v561 = vpop.f32.mrb[0].mxu0
  %v562 = vpop.f32.mrb[0].mxu0
  %v563 = vadd.f32 0.0, %v562
  %v564 = vpop.f32.mrb[0].mxu0
  %565 = vmatprep.mubr.bf16.mxu0 0
  %566 = vmatmul.mubr.bf16.gmra.mrb[0].mxu0 %v419
  %v567 = vpop.f32.mrb[0].mxu0
  %v568 = vadd.f32 0.0, %v567
  %v569 = vpop.f32.mrb[0].mxu0
  %v570 = vpop.f32.mrb[0].mxu0
  %v571 = vadd.f32 0.0, %v570
  %v572 = vpop.f32.mrb[0].mxu0
  %573 = vmatprep.mubr.bf16.mxu0 0
  %574 = vmatmul.mubr.bf16.gmra.mrb[0].mxu0 %v420
  %v575 = vpop.f32.mrb[0].mxu0
  %v576 = vadd.f32 0.0, %v575
  %v577 = vpop.f32.mrb[0].mxu0
  %v578 = vpop.f32.mrb[0].mxu0
  %v579 = vadd.f32 0.0, %v578
  %v580 = vpop.f32.mrb[0].mxu0
  %581 = vdwg.mxu0
  %v582 = vld [vmem:[%s4] sm:$0xf]
  %v583 = vld [vmem:[%s4 + $0x4] sm:$0xf]
  %v584 = vld [vmem:[%s4 + $0x8] sm:$0xf]
  %v585 = vld [vmem:[%s4 + $0xc] sm:$0xf]
  %v586 = vld [vmem:[%s4 + $0x10] sm:$0xf]
  %v587 = vld [vmem:[%s4 + $0x14] sm:$0xf]
  %v588 = vld [vmem:[%s4 + $0x18] sm:$0xf]
  %v589 = vld [vmem:[%s4 + $0x1c] sm:$0xf]
  %v590 = vld [vmem:[%s4 + $0x20] sm:$0xf]
  %v591 = vld [vmem:[%s4 + $0x24] sm:$0xf]
  %v592 = vld [vmem:[%s4 + $0x28] sm:$0xf]
  %v593 = vld [vmem:[%s4 + $0x2c] sm:$0xf]
  %v594 = vld [vmem:[%s4 + $0x30] sm:$0xf]
  %v595 = vld [vmem:[%s4 + $0x34] sm:$0xf]
  %v596 = vld [vmem:[%s4 + $0x38] sm:$0xf]
  %v597 = vld [vmem:[%s4 + $0x3c] sm:$0xf]
  %v598 = vpack.c.bf16 %v523, %v520
  %v599 = vpack.c.bf16 %v531, %v528
  %v600 = vpack.c.bf16 %v539, %v536
  %v601 = vpack.c.bf16 %v547, %v544
  %v602 = vpack.c.bf16 %v555, %v552
  %v603 = vpack.c.bf16 %v563, %v560
  %v604 = vpack.c.bf16 %v571, %v568
  %v605 = vpack.c.bf16 %v579, %v576
  %v606 = vld [vmem:[%s6] sm:$0x1]
  %v608 = vlaneseq
  %v609 = vshrl.u32 %v608, 7
  %v610 = vsub.s32 0, %v609
  %v611 = vrot.slane %v606, %v610
  %v629 = vunpack.c.l.b16 %v582
  %v630 = vunpack.c.l.b16 %v583
  %v631 = vunpack.c.l.b16 %v584
  %v632 = vunpack.c.l.b16 %v585
  %v633 = vunpack.c.l.b16 %v586
  %v634 = vunpack.c.l.b16 %v587
  %v635 = vunpack.c.l.b16 %v588
  %v636 = vunpack.c.l.b16 %v589
  %v637 = vunpack.c.l.b16 %v590
  %v638 = vunpack.c.l.b16 %v591
  %v639 = vunpack.c.l.b16 %v592
  %v640 = vunpack.c.l.b16 %v593
  %v641 = vunpack.c.l.b16 %v594
  %v642 = vunpack.c.l.b16 %v595
  %v643 = vunpack.c.l.b16 %v596
  %v644 = vunpack.c.l.b16 %v597
  %v645 = vpack.c.b16 %v630, %v629
  %v646 = vpack.c.b16 %v632, %v631
  %v647 = vpack.c.b16 %v634, %v633
  %v648 = vpack.c.b16 %v636, %v635
  %v649 = vpack.c.b16 %v638, %v637
  %v650 = vpack.c.b16 %v640, %v639
  %v651 = vpack.c.b16 %v642, %v641
  %v652 = vpack.c.b16 %v644, %v643
  %661 = vmatprep.subr.bf16.mxu0 0
  %662 = vmatpush1.bf16.msra.mxu0 %v598
  %663 = vmatprep.subr.bf16.mxu0 0
  %664 = vmatpush1.bf16.msra.mxu0 %v599
  %665 = vmatprep.subr.bf16.mxu0 0
  %666 = vmatpush1.bf16.msra.mxu0 %v600
  %667 = vmatprep.subr.bf16.mxu0 0
  %668 = vmatpush1.bf16.msra.mxu0 %v601
  %669 = vmatprep.subr.bf16.mxu0 0
  %670 = vmatpush1.bf16.msra.mxu0 %v602
  %671 = vmatprep.subr.bf16.mxu0 0
  %672 = vmatpush1.bf16.msra.mxu0 %v603
  %673 = vmatprep.subr.bf16.mxu0 0
  %674 = vmatpush1.bf16.msra.mxu0 %v604
  %675 = vmatprep.subr.bf16.mxu0 0
  %676 = vmatpush1.bf16.msra.mxu0 %v605
  %677 = vmatprep.subr.bf16.mxu0 0
  %678 = vmatpush1.bf16.msra.mxu0 0
  %679 = vmatprep.subr.bf16.mxu0 0
  %680 = vmatpush1.bf16.msra.mxu0 0
  %681 = vmatprep.subr.bf16.mxu0 0
  %682 = vmatpush1.bf16.msra.mxu0 0
  %683 = vmatprep.subr.bf16.mxu0 0
  %684 = vmatpush1.bf16.msra.mxu0 0
  %685 = vmatprep.subr.bf16.mxu0 0
  %686 = vmatpush1.bf16.msra.mxu0 0
  %687 = vmatprep.subr.bf16.mxu0 0
  %688 = vmatpush1.bf16.msra.mxu0 0
  %689 = vmatprep.subr.bf16.mxu0 0
  %690 = vmatpush1.bf16.msra.mxu0 0
  %691 = vmatprep.subr.bf16.mxu0 0
  %692 = vmatpush1.bf16.msra.mxu0 0
  %693 = vmatprep.mubr.bf16.mxu0 0
  %694 = vmatmul.mubr.bf16.gmra.mrb[0].mxu0 %v645
  %v695 = vpop.f32.mrb[0].mxu0
  %v696 = vadd.f32 %v611, %v695
  %v697 = vpop.f32.mrb[0].mxu0
  %v698 = vpop.f32.mrb[0].mxu0
  %v699 = vadd.f32 %v611, %v698
  %v700 = vpop.f32.mrb[0].mxu0
  %701 = vmatprep.mubr.bf16.mxu0 0
  %702 = vmatmul.mubr.bf16.gmra.mrb[0].mxu0 %v646
  %v703 = vpop.f32.mrb[0].mxu0
  %v704 = vadd.f32 %v611, %v703
  %v705 = vpop.f32.mrb[0].mxu0
  %v706 = vpop.f32.mrb[0].mxu0
  %v707 = vadd.f32 %v611, %v706
  %v708 = vpop.f32.mrb[0].mxu0
  %709 = vmatprep.mubr.bf16.mxu0 0
  %710 = vmatmul.mubr.bf16.gmra.mrb[0].mxu0 %v647
  %v711 = vpop.f32.mrb[0].mxu0
  %v712 = vadd.f32 %v611, %v711
  %v713 = vpop.f32.mrb[0].mxu0
  %v714 = vpop.f32.mrb[0].mxu0
  %v715 = vadd.f32 %v611, %v714
  %v716 = vpop.f32.mrb[0].mxu0
  %717 = vmatprep.mubr.bf16.mxu0 0
  %718 = vmatmul.mubr.bf16.gmra.mrb[0].mxu0 %v648
  %v719 = vpop.f32.mrb[0].mxu0
  %v720 = vadd.f32 %v611, %v719
  %v721 = vpop.f32.mrb[0].mxu0
  %v722 = vpop.f32.mrb[0].mxu0
  %v723 = vadd.f32 %v611, %v722
  %v724 = vpop.f32.mrb[0].mxu0
  %725 = vmatprep.mubr.bf16.mxu0 0
  %726 = vmatmul.mubr.bf16.gmra.mrb[0].mxu0 %v649
  %v727 = vpop.f32.mrb[0].mxu0
  %v728 = vadd.f32 %v611, %v727
  %v729 = vpop.f32.mrb[0].mxu0
  %v730 = vpop.f32.mrb[0].mxu0
  %v731 = vadd.f32 %v611, %v730
  %v732 = vpop.f32.mrb[0].mxu0
  %733 = vmatprep.mubr.bf16.mxu0 0
  %734 = vmatmul.mubr.bf16.gmra.mrb[0].mxu0 %v650
  %v735 = vpop.f32.mrb[0].mxu0
  %v736 = vadd.f32 %v611, %v735
  %v737 = vpop.f32.mrb[0].mxu0
  %v738 = vpop.f32.mrb[0].mxu0
  %v739 = vadd.f32 %v611, %v738
  %v740 = vpop.f32.mrb[0].mxu0
  %741 = vmatprep.mubr.bf16.mxu0 0
  %742 = vmatmul.mubr.bf16.gmra.mrb[0].mxu0 %v651
  %v743 = vpop.f32.mrb[0].mxu0
  %v744 = vadd.f32 %v611, %v743
  %v745 = vpop.f32.mrb[0].mxu0
  %v746 = vpop.f32.mrb[0].mxu0
  %v747 = vadd.f32 %v611, %v746
  %v748 = vpop.f32.mrb[0].mxu0
  %749 = vmatprep.mubr.bf16.mxu0 0
  %750 = vmatmul.mubr.bf16.gmra.mrb[0].mxu0 %v652
  %v751 = vpop.f32.mrb[0].mxu0
  %v752 = vadd.f32 %v611, %v751
  %v753 = vpop.f32.mrb[0].mxu0
  %v754 = vpop.f32.mrb[0].mxu0
  %v755 = vadd.f32 %v611, %v754
  %v756 = vpop.f32.mrb[0].mxu0
  %757 = vdwg.mxu0
  %v758 = vmul.f32 %v696, 0.5
  %v759 = vmul.f32 %v699, 0.5
  %v760 = vmul.f32 %v704, 0.5
  %v761 = vmul.f32 %v707, 0.5
  %v762 = vmul.f32 %v712, 0.5
  %v763 = vmul.f32 %v715, 0.5
  %v764 = vmul.f32 %v720, 0.5
  %v765 = vmul.f32 %v723, 0.5
  %v766 = vmul.f32 %v728, 0.5
  %v767 = vmul.f32 %v731, 0.5
  %v768 = vmul.f32 %v736, 0.5
  %v769 = vmul.f32 %v739, 0.5
  %v770 = vmul.f32 %v744, 0.5
  %v771 = vmul.f32 %v747, 0.5
  %v772 = vmul.f32 %v752, 0.5
  %v773 = vmul.f32 %v755, 0.5
  %v774 = vmul.f32 %v335, 0.5
  %v775 = vmul.f32 %v338, 0.5
  %v776 = vmul.f32 %v343, 0.5
  %v777 = vmul.f32 %v346, 0.5
  %v778 = vmul.f32 %v351, 0.5
  %v779 = vmul.f32 %v354, 0.5
  %v780 = vmul.f32 %v359, 0.5
  %v781 = vmul.f32 %v362, 0.5
  %v782 = vmul.f32 %v367, 0.5
  %v783 = vmul.f32 %v370, 0.5
  %v784 = vmul.f32 %v375, 0.5
  %v785 = vmul.f32 %v378, 0.5
  %v786 = vmul.f32 %v383, 0.5
  %v787 = vmul.f32 %v386, 0.5
  %v788 = vmul.f32 %v391, 0.5
  %v789 = vmul.f32 %v394, 0.5
  %v790 = vadd.f32 %v758, %v774
  %v791 = vadd.f32 %v759, %v775
  %v792 = vadd.f32 %v760, %v776
  %v793 = vadd.f32 %v761, %v777
  %v794 = vadd.f32 %v762, %v778
  %v795 = vadd.f32 %v763, %v779
  %v796 = vadd.f32 %v764, %v780
  %v797 = vadd.f32 %v765, %v781
  %v798 = vadd.f32 %v766, %v782
  %v799 = vadd.f32 %v767, %v783
  %v800 = vadd.f32 %v768, %v784
  %v801 = vadd.f32 %v769, %v785
  %v802 = vadd.f32 %v770, %v786
  %v803 = vadd.f32 %v771, %v787
  %v804 = vadd.f32 %v772, %v788
  %v805 = vadd.f32 %v773, %v789
  %v806 = vmax.f32 %v790, 0.0
  %v807 = vmax.f32 %v791, 0.0
  %v808 = vmax.f32 %v792, 0.0
  %v809 = vmax.f32 %v793, 0.0
  %v810 = vmax.f32 %v794, 0.0
  %v811 = vmax.f32 %v795, 0.0
  %v812 = vmax.f32 %v796, 0.0
  %v813 = vmax.f32 %v797, 0.0
  %v814 = vmax.f32 %v798, 0.0
  %v815 = vmax.f32 %v799, 0.0
  %v816 = vmax.f32 %v800, 0.0
  %v817 = vmax.f32 %v801, 0.0
  %v818 = vmax.f32 %v802, 0.0
  %v819 = vmax.f32 %v803, 0.0
  %v820 = vmax.f32 %v804, 0.0
  %v821 = vmax.f32 %v805, 0.0
  %v822 = vpack.c.bf16 %v807, %v806
  %v823 = vpack.c.bf16 %v809, %v808
  %v824 = vpack.c.bf16 %v811, %v810
  %v825 = vpack.c.bf16 %v813, %v812
  %v826 = vpack.c.bf16 %v815, %v814
  %v827 = vpack.c.bf16 %v817, %v816
  %v828 = vpack.c.bf16 %v819, %v818
  %v829 = vpack.c.bf16 %v821, %v820
  %v830 = vld [vmem:[%s8] sm:$0xf]
  %v831 = vld [vmem:[%s8 + $0x4] sm:$0xf]
  %v832 = vld [vmem:[%s8 + $0x8] sm:$0xf]
  %v833 = vld [vmem:[%s8 + $0xc] sm:$0xf]
  %v834 = vld [vmem:[%s8 + $0x10] sm:$0xf]
  %v835 = vld [vmem:[%s8 + $0x14] sm:$0xf]
  %v836 = vld [vmem:[%s8 + $0x18] sm:$0xf]
  %v837 = vld [vmem:[%s8 + $0x1c] sm:$0xf]
  %v838 = vld [vmem:[%s8 + $0x20] sm:$0xf]
  %v839 = vld [vmem:[%s8 + $0x24] sm:$0xf]
  %v840 = vld [vmem:[%s8 + $0x28] sm:$0xf]
  %v841 = vld [vmem:[%s8 + $0x2c] sm:$0xf]
  %v842 = vld [vmem:[%s8 + $0x30] sm:$0xf]
  %v843 = vld [vmem:[%s8 + $0x34] sm:$0xf]
  %v844 = vld [vmem:[%s8 + $0x38] sm:$0xf]
  %v845 = vld [vmem:[%s8 + $0x3c] sm:$0xf]
  %v862 = vunpack.c.l.b16 %v830
  %v863 = vunpack.c.l.b16 %v831
  %v864 = vunpack.c.l.b16 %v832
  %v865 = vunpack.c.l.b16 %v833
  %v866 = vunpack.c.l.b16 %v834
  %v867 = vunpack.c.l.b16 %v835
  %v868 = vunpack.c.l.b16 %v836
  %v869 = vunpack.c.l.b16 %v837
  %v870 = vunpack.c.l.b16 %v838
  %v871 = vunpack.c.l.b16 %v839
  %v872 = vunpack.c.l.b16 %v840
  %v873 = vunpack.c.l.b16 %v841
  %v874 = vunpack.c.l.b16 %v842
  %v875 = vunpack.c.l.b16 %v843
  %v876 = vunpack.c.l.b16 %v844
  %v877 = vunpack.c.l.b16 %v845
  %v878 = vpack.c.b16 %v863, %v862
  %v879 = vpack.c.b16 %v865, %v864
  %v880 = vpack.c.b16 %v867, %v866
  %v881 = vpack.c.b16 %v869, %v868
  %v882 = vpack.c.b16 %v871, %v870
  %v883 = vpack.c.b16 %v873, %v872
  %v884 = vpack.c.b16 %v875, %v874
  %v885 = vpack.c.b16 %v877, %v876
  %894 = vmatprep.subr.bf16.mxu0 0
  %895 = vmatpush1.bf16.msra.mxu0 %v878
  %896 = vmatprep.subr.bf16.mxu0 0
  %897 = vmatpush1.bf16.msra.mxu0 %v879
  %898 = vmatprep.subr.bf16.mxu0 0
  %899 = vmatpush1.bf16.msra.mxu0 %v880
  %900 = vmatprep.subr.bf16.mxu0 0
  %901 = vmatpush1.bf16.msra.mxu0 %v881
  %902 = vmatprep.subr.bf16.mxu0 0
  %903 = vmatpush1.bf16.msra.mxu0 %v882
  %904 = vmatprep.subr.bf16.mxu0 0
  %905 = vmatpush1.bf16.msra.mxu0 %v883
  %906 = vmatprep.subr.bf16.mxu0 0
  %907 = vmatpush1.bf16.msra.mxu0 %v884
  %908 = vmatprep.subr.bf16.mxu0 0
  %909 = vmatpush1.bf16.msra.mxu0 %v885
  %910 = vmatprep.subr.bf16.mxu0 0
  %911 = vmatpush1.bf16.msra.mxu0 0
  %912 = vmatprep.subr.bf16.mxu0 0
  %913 = vmatpush1.bf16.msra.mxu0 0
  %914 = vmatprep.subr.bf16.mxu0 0
  %915 = vmatpush1.bf16.msra.mxu0 0
  %916 = vmatprep.subr.bf16.mxu0 0
  %917 = vmatpush1.bf16.msra.mxu0 0
  %918 = vmatprep.subr.bf16.mxu0 0
  %919 = vmatpush1.bf16.msra.mxu0 0
  %920 = vmatprep.subr.bf16.mxu0 0
  %921 = vmatpush1.bf16.msra.mxu0 0
  %922 = vmatprep.subr.bf16.mxu0 0
  %923 = vmatpush1.bf16.msra.mxu0 0
  %924 = vmatprep.subr.bf16.mxu0 0
  %925 = vmatpush1.bf16.msra.mxu0 0
  %926 = vmatprep.mubr.bf16.mxu0 0
  %927 = vmatmul.mubr.bf16.gmra.mrb[0].mxu0 %v822
  %v928 = vpop.f32.mrb[0].mxu0
  %v929 = vadd.f32 0.0, %v928
  %v930 = vpop.f32.mrb[0].mxu0
  %v931 = vpop.f32.mrb[0].mxu0
  %v932 = vadd.f32 0.0, %v931
  %v933 = vpop.f32.mrb[0].mxu0
  %934 = vmatprep.mubr.bf16.mxu0 0
  %935 = vmatmul.mubr.bf16.gmra.mrb[0].mxu0 %v823
  %v936 = vpop.f32.mrb[0].mxu0
  %v937 = vadd.f32 0.0, %v936
  %v938 = vpop.f32.mrb[0].mxu0
  %v939 = vpop.f32.mrb[0].mxu0
  %v940 = vadd.f32 0.0, %v939
  %v941 = vpop.f32.mrb[0].mxu0
  %942 = vmatprep.mubr.bf16.mxu0 0
  %943 = vmatmul.mubr.bf16.gmra.mrb[0].mxu0 %v824
  %v944 = vpop.f32.mrb[0].mxu0
  %v945 = vadd.f32 0.0, %v944
  %v946 = vpop.f32.mrb[0].mxu0
  %v947 = vpop.f32.mrb[0].mxu0
  %v948 = vadd.f32 0.0, %v947
  %v949 = vpop.f32.mrb[0].mxu0
  %950 = vmatprep.mubr.bf16.mxu0 0
  %951 = vmatmul.mubr.bf16.gmra.mrb[0].mxu0 %v825
  %v952 = vpop.f32.mrb[0].mxu0
  %v953 = vadd.f32 0.0, %v952
  %v954 = vpop.f32.mrb[0].mxu0
  %v955 = vpop.f32.mrb[0].mxu0
  %v956 = vadd.f32 0.0, %v955
  %v957 = vpop.f32.mrb[0].mxu0
  %958 = vmatprep.mubr.bf16.mxu0 0
  %959 = vmatmul.mubr.bf16.gmra.mrb[0].mxu0 %v826
  %v960 = vpop.f32.mrb[0].mxu0
  %v961 = vadd.f32 0.0, %v960
  %v962 = vpop.f32.mrb[0].mxu0
  %v963 = vpop.f32.mrb[0].mxu0
  %v964 = vadd.f32 0.0, %v963
  %v965 = vpop.f32.mrb[0].mxu0
  %966 = vmatprep.mubr.bf16.mxu0 0
  %967 = vmatmul.mubr.bf16.gmra.mrb[0].mxu0 %v827
  %v968 = vpop.f32.mrb[0].mxu0
  %v969 = vadd.f32 0.0, %v968
  %v970 = vpop.f32.mrb[0].mxu0
  %v971 = vpop.f32.mrb[0].mxu0
  %v972 = vadd.f32 0.0, %v971
  %v973 = vpop.f32.mrb[0].mxu0
  %974 = vmatprep.mubr.bf16.mxu0 0
  %975 = vmatmul.mubr.bf16.gmra.mrb[0].mxu0 %v828
  %v976 = vpop.f32.mrb[0].mxu0
  %v977 = vadd.f32 0.0, %v976
  %v978 = vpop.f32.mrb[0].mxu0
  %v979 = vpop.f32.mrb[0].mxu0
  %v980 = vadd.f32 0.0, %v979
  %v981 = vpop.f32.mrb[0].mxu0
  %982 = vmatprep.mubr.bf16.mxu0 0
  %983 = vmatmul.mubr.bf16.gmra.mrb[0].mxu0 %v829
  %v984 = vpop.f32.mrb[0].mxu0
  %v985 = vadd.f32 0.0, %v984
  %v986 = vpop.f32.mrb[0].mxu0
  %v987 = vpop.f32.mrb[0].mxu0
  %v988 = vadd.f32 0.0, %v987
  %v989 = vpop.f32.mrb[0].mxu0
  %990 = vdwg.mxu0
  %v991 = vld [vmem:[%s7] sm:$0xf]
  %v992 = vld [vmem:[%s7 + $0x4] sm:$0xf]
  %v993 = vld [vmem:[%s7 + $0x8] sm:$0xf]
  %v994 = vld [vmem:[%s7 + $0xc] sm:$0xf]
  %v995 = vld [vmem:[%s7 + $0x10] sm:$0xf]
  %v996 = vld [vmem:[%s7 + $0x14] sm:$0xf]
  %v997 = vld [vmem:[%s7 + $0x18] sm:$0xf]
  %v998 = vld [vmem:[%s7 + $0x1c] sm:$0xf]
  %v999 = vld [vmem:[%s7 + $0x20] sm:$0xf]
  %v1000 = vld [vmem:[%s7 + $0x24] sm:$0xf]
  %v1001 = vld [vmem:[%s7 + $0x28] sm:$0xf]
  %v1002 = vld [vmem:[%s7 + $0x2c] sm:$0xf]
  %v1003 = vld [vmem:[%s7 + $0x30] sm:$0xf]
  %v1004 = vld [vmem:[%s7 + $0x34] sm:$0xf]
  %v1005 = vld [vmem:[%s7 + $0x38] sm:$0xf]
  %v1006 = vld [vmem:[%s7 + $0x3c] sm:$0xf]
  %v1007 = vpack.c.bf16 %v932, %v929
  %v1008 = vpack.c.bf16 %v940, %v937
  %v1009 = vpack.c.bf16 %v948, %v945
  %v1010 = vpack.c.bf16 %v956, %v953
  %v1011 = vpack.c.bf16 %v964, %v961
  %v1012 = vpack.c.bf16 %v972, %v969
  %v1013 = vpack.c.bf16 %v980, %v977
  %v1014 = vpack.c.bf16 %v988, %v985
  %v1015 = vld [vmem:[%s9] sm:$0x1]
  %v1017 = vlaneseq
  %v1018 = vshrl.u32 %v1017, 7
  %v1019 = vsub.s32 0, %v1018
  %v1020 = vrot.slane %v1015, %v1019
  %v1038 = vunpack.c.l.b16 %v991
  %v1039 = vunpack.c.l.b16 %v992
  %v1040 = vunpack.c.l.b16 %v993
  %v1041 = vunpack.c.l.b16 %v994
  %v1042 = vunpack.c.l.b16 %v995
  %v1043 = vunpack.c.l.b16 %v996
  %v1044 = vunpack.c.l.b16 %v997
  %v1045 = vunpack.c.l.b16 %v998
  %v1046 = vunpack.c.l.b16 %v999
  %v1047 = vunpack.c.l.b16 %v1000
  %v1048 = vunpack.c.l.b16 %v1001
  %v1049 = vunpack.c.l.b16 %v1002
  %v1050 = vunpack.c.l.b16 %v1003
  %v1051 = vunpack.c.l.b16 %v1004
  %v1052 = vunpack.c.l.b16 %v1005
  %v1053 = vunpack.c.l.b16 %v1006
  %v1054 = vpack.c.b16 %v1039, %v1038
  %v1055 = vpack.c.b16 %v1041, %v1040
  %v1056 = vpack.c.b16 %v1043, %v1042
  %v1057 = vpack.c.b16 %v1045, %v1044
  %v1058 = vpack.c.b16 %v1047, %v1046
  %v1059 = vpack.c.b16 %v1049, %v1048
  %v1060 = vpack.c.b16 %v1051, %v1050
  %v1061 = vpack.c.b16 %v1053, %v1052
  %1070 = vmatprep.subr.bf16.mxu0 0
  %1071 = vmatpush1.bf16.msra.mxu0 %v1007
  %1072 = vmatprep.subr.bf16.mxu0 0
  %1073 = vmatpush1.bf16.msra.mxu0 %v1008
  %1074 = vmatprep.subr.bf16.mxu0 0
  %1075 = vmatpush1.bf16.msra.mxu0 %v1009
  %1076 = vmatprep.subr.bf16.mxu0 0
  %1077 = vmatpush1.bf16.msra.mxu0 %v1010
  %1078 = vmatprep.subr.bf16.mxu0 0
  %1079 = vmatpush1.bf16.msra.mxu0 %v1011
  %1080 = vmatprep.subr.bf16.mxu0 0
  %1081 = vmatpush1.bf16.msra.mxu0 %v1012
  %1082 = vmatprep.subr.bf16.mxu0 0
  %1083 = vmatpush1.bf16.msra.mxu0 %v1013
  %1084 = vmatprep.subr.bf16.mxu0 0
  %1085 = vmatpush1.bf16.msra.mxu0 %v1014
  %1086 = vmatprep.subr.bf16.mxu0 0
  %1087 = vmatpush1.bf16.msra.mxu0 0
  %1088 = vmatprep.subr.bf16.mxu0 0
  %1089 = vmatpush1.bf16.msra.mxu0 0
  %1090 = vmatprep.subr.bf16.mxu0 0
  %1091 = vmatpush1.bf16.msra.mxu0 0
  %1092 = vmatprep.subr.bf16.mxu0 0
  %1093 = vmatpush1.bf16.msra.mxu0 0
  %1094 = vmatprep.subr.bf16.mxu0 0
  %1095 = vmatpush1.bf16.msra.mxu0 0
  %1096 = vmatprep.subr.bf16.mxu0 0
  %1097 = vmatpush1.bf16.msra.mxu0 0
  %1098 = vmatprep.subr.bf16.mxu0 0
  %1099 = vmatpush1.bf16.msra.mxu0 0
  %1100 = vmatprep.subr.bf16.mxu0 0
  %1101 = vmatpush1.bf16.msra.mxu0 0
  %1102 = vmatprep.mubr.bf16.mxu0 0
  %1103 = vmatmul.mubr.bf16.gmra.mrb[0].mxu0 %v1054
  %v1104 = vpop.f32.mrb[0].mxu0
  %v1105 = vadd.f32 %v1020, %v1104
  %v1106 = vpop.f32.mrb[0].mxu0
  %v1107 = vpop.f32.mrb[0].mxu0
  %v1108 = vadd.f32 %v1020, %v1107
  %v1109 = vpop.f32.mrb[0].mxu0
  %1110 = vmatprep.mubr.bf16.mxu0 0
  %1111 = vmatmul.mubr.bf16.gmra.mrb[0].mxu0 %v1055
  %v1112 = vpop.f32.mrb[0].mxu0
  %v1113 = vadd.f32 %v1020, %v1112
  %v1114 = vpop.f32.mrb[0].mxu0
  %v1115 = vpop.f32.mrb[0].mxu0
  %v1116 = vadd.f32 %v1020, %v1115
  %v1117 = vpop.f32.mrb[0].mxu0
  %1118 = vmatprep.mubr.bf16.mxu0 0
  %1119 = vmatmul.mubr.bf16.gmra.mrb[0].mxu0 %v1056
  %v1120 = vpop.f32.mrb[0].mxu0
  %v1121 = vadd.f32 %v1020, %v1120
  %v1122 = vpop.f32.mrb[0].mxu0
  %v1123 = vpop.f32.mrb[0].mxu0
  %v1124 = vadd.f32 %v1020, %v1123
  %v1125 = vpop.f32.mrb[0].mxu0
  %1126 = vmatprep.mubr.bf16.mxu0 0
  %1127 = vmatmul.mubr.bf16.gmra.mrb[0].mxu0 %v1057
  %v1128 = vpop.f32.mrb[0].mxu0
  %v1129 = vadd.f32 %v1020, %v1128
  %v1130 = vpop.f32.mrb[0].mxu0
  %v1131 = vpop.f32.mrb[0].mxu0
  %v1132 = vadd.f32 %v1020, %v1131
  %v1133 = vpop.f32.mrb[0].mxu0
  %1134 = vmatprep.mubr.bf16.mxu0 0
  %1135 = vmatmul.mubr.bf16.gmra.mrb[0].mxu0 %v1058
  %v1136 = vpop.f32.mrb[0].mxu0
  %v1137 = vadd.f32 %v1020, %v1136
  %v1138 = vpop.f32.mrb[0].mxu0
  %v1139 = vpop.f32.mrb[0].mxu0
  %v1140 = vadd.f32 %v1020, %v1139
  %v1141 = vpop.f32.mrb[0].mxu0
  %1142 = vmatprep.mubr.bf16.mxu0 0
  %1143 = vmatmul.mubr.bf16.gmra.mrb[0].mxu0 %v1059
  %v1144 = vpop.f32.mrb[0].mxu0
  %v1145 = vadd.f32 %v1020, %v1144
  %v1146 = vpop.f32.mrb[0].mxu0
  %v1147 = vpop.f32.mrb[0].mxu0
  %v1148 = vadd.f32 %v1020, %v1147
  %v1149 = vpop.f32.mrb[0].mxu0
  %1150 = vmatprep.mubr.bf16.mxu0 0
  %1151 = vmatmul.mubr.bf16.gmra.mrb[0].mxu0 %v1060
  %v1152 = vpop.f32.mrb[0].mxu0
  %v1153 = vadd.f32 %v1020, %v1152
  %v1154 = vpop.f32.mrb[0].mxu0
  %v1155 = vpop.f32.mrb[0].mxu0
  %v1156 = vadd.f32 %v1020, %v1155
  %v1157 = vpop.f32.mrb[0].mxu0
  %1158 = vmatprep.mubr.bf16.mxu0 0
  %1159 = vmatmul.mubr.bf16.gmra.mrb[0].mxu0 %v1061
  %v1160 = vpop.f32.mrb[0].mxu0
  %v1161 = vadd.f32 %v1020, %v1160
  %v1162 = vpop.f32.mrb[0].mxu0
  %v1163 = vpop.f32.mrb[0].mxu0
  %v1164 = vadd.f32 %v1020, %v1163
  %v1165 = vpop.f32.mrb[0].mxu0
  %1166 = vdwg.mxu0
  %v1167 = vlaneseq
  %v1168 = vand.u32 %v1167, 127
  %vm1169 = vcmp.lt.s32.totalorder %v1168, 4
  %v1170 = vsel %vm1169, %v1105, -1e+30
  %v1171 = vsel %vm1169, %v1108, -1e+30
  %v1172 = vsel %vm1169, %v1113, -1e+30
  %v1173 = vsel %vm1169, %v1116, -1e+30
  %v1174 = vsel %vm1169, %v1121, -1e+30
  %v1175 = vsel %vm1169, %v1124, -1e+30
  %v1176 = vsel %vm1169, %v1129, -1e+30
  %v1177 = vsel %vm1169, %v1132, -1e+30
  %v1178 = vsel %vm1169, %v1137, -1e+30
  %v1179 = vsel %vm1169, %v1140, -1e+30
  %v1180 = vsel %vm1169, %v1145, -1e+30
  %v1181 = vsel %vm1169, %v1148, -1e+30
  %v1182 = vsel %vm1169, %v1153, -1e+30
  %v1183 = vsel %vm1169, %v1156, -1e+30
  %v1184 = vsel %vm1169, %v1161, -1e+30
  %v1185 = vsel %vm1169, %v1164, -1e+30
  %1186 = vmax.xlane.f32.xlu0 %v1170
  %v1187 = vpop.xlane.xlu0 %1186
  %1188 = vmax.xlane.f32.xlu0 %v1171
  %v1189 = vpop.xlane.xlu0 %1188
  %1190 = vmax.xlane.f32.xlu0 %v1172
  %v1191 = vpop.xlane.xlu0 %1190
  %1192 = vmax.xlane.f32.xlu0 %v1173
  %v1193 = vpop.xlane.xlu0 %1192
  %1194 = vmax.xlane.f32.xlu0 %v1174
  %v1195 = vpop.xlane.xlu0 %1194
  %1196 = vmax.xlane.f32.xlu0 %v1175
  %v1197 = vpop.xlane.xlu0 %1196
  %1198 = vmax.xlane.f32.xlu0 %v1176
  %v1199 = vpop.xlane.xlu0 %1198
  %1200 = vmax.xlane.f32.xlu0 %v1177
  %v1201 = vpop.xlane.xlu0 %1200
  %1202 = vmax.xlane.f32.xlu0 %v1178
  %v1203 = vpop.xlane.xlu0 %1202
  %1204 = vmax.xlane.f32.xlu0 %v1179
  %v1205 = vpop.xlane.xlu0 %1204
  %1206 = vmax.xlane.f32.xlu0 %v1180
  %v1207 = vpop.xlane.xlu0 %1206
  %1208 = vmax.xlane.f32.xlu0 %v1181
  %v1209 = vpop.xlane.xlu0 %1208
  %1210 = vmax.xlane.f32.xlu0 %v1182
  %v1211 = vpop.xlane.xlu0 %1210
  %1212 = vmax.xlane.f32.xlu0 %v1183
  %v1213 = vpop.xlane.xlu0 %1212
  %1214 = vmax.xlane.f32.xlu0 %v1184
  %v1215 = vpop.xlane.xlu0 %1214
  %1216 = vmax.xlane.f32.xlu0 %v1185
  %v1217 = vpop.xlane.xlu0 %1216
  %v1218 = vsub.f32 %v1170, %v1187
  %v1219 = vsub.f32 %v1171, %v1189
  %v1220 = vsub.f32 %v1172, %v1191
  %v1221 = vsub.f32 %v1173, %v1193
  %v1222 = vsub.f32 %v1174, %v1195
  %v1223 = vsub.f32 %v1175, %v1197
  %v1224 = vsub.f32 %v1176, %v1199
  %v1225 = vsub.f32 %v1177, %v1201
  %v1226 = vsub.f32 %v1178, %v1203
  %v1227 = vsub.f32 %v1179, %v1205
  %v1228 = vsub.f32 %v1180, %v1207
  %v1229 = vsub.f32 %v1181, %v1209
  %v1230 = vsub.f32 %v1182, %v1211
  %v1231 = vsub.f32 %v1183, %v1213
  %v1232 = vsub.f32 %v1184, %v1215
  %v1233 = vsub.f32 %v1185, %v1217
  %v1234 = vmul.f32 %v1218, 1.442695
  %v1235 = vpow.pop %v1234
  %v1236 = vmul.f32 %v1219, 1.442695
  %v1237 = vpow.pop %v1236
  %v1238 = vmul.f32 %v1220, 1.442695
  %v1239 = vpow.pop %v1238
  %v1240 = vmul.f32 %v1221, 1.442695
  %v1241 = vpow.pop %v1240
  %v1242 = vmul.f32 %v1222, 1.442695
  %v1243 = vpow.pop %v1242
  %v1244 = vmul.f32 %v1223, 1.442695
  %v1245 = vpow.pop %v1244
  %v1246 = vmul.f32 %v1224, 1.442695
  %v1247 = vpow.pop %v1246
  %v1248 = vmul.f32 %v1225, 1.442695
  %v1249 = vpow.pop %v1248
  %v1250 = vmul.f32 %v1226, 1.442695
  %v1251 = vpow.pop %v1250
  %v1252 = vmul.f32 %v1227, 1.442695
  %v1253 = vpow.pop %v1252
  %v1254 = vmul.f32 %v1228, 1.442695
  %v1255 = vpow.pop %v1254
  %v1256 = vmul.f32 %v1229, 1.442695
  %v1257 = vpow.pop %v1256
  %v1258 = vmul.f32 %v1230, 1.442695
  %v1259 = vpow.pop %v1258
  %v1260 = vmul.f32 %v1231, 1.442695
  %v1261 = vpow.pop %v1260
  %v1262 = vmul.f32 %v1232, 1.442695
  %v1263 = vpow.pop %v1262
  %v1264 = vmul.f32 %v1233, 1.442695
  %v1265 = vpow.pop %v1264
  %1266 = vadd.xlane.f32.xlu0 %v1235
  %v1267 = vpop.xlane.xlu0 %1266
  %1268 = vadd.xlane.f32.xlu0 %v1237
  %v1269 = vpop.xlane.xlu0 %1268
  %1270 = vadd.xlane.f32.xlu0 %v1239
  %v1271 = vpop.xlane.xlu0 %1270
  %1272 = vadd.xlane.f32.xlu0 %v1241
  %v1273 = vpop.xlane.xlu0 %1272
  %1274 = vadd.xlane.f32.xlu0 %v1243
  %v1275 = vpop.xlane.xlu0 %1274
  %1276 = vadd.xlane.f32.xlu0 %v1245
  %v1277 = vpop.xlane.xlu0 %1276
  %1278 = vadd.xlane.f32.xlu0 %v1247
  %v1279 = vpop.xlane.xlu0 %1278
  %1280 = vadd.xlane.f32.xlu0 %v1249
  %v1281 = vpop.xlane.xlu0 %1280
  %1282 = vadd.xlane.f32.xlu0 %v1251
  %v1283 = vpop.xlane.xlu0 %1282
  %1284 = vadd.xlane.f32.xlu0 %v1253
  %v1285 = vpop.xlane.xlu0 %1284
  %1286 = vadd.xlane.f32.xlu0 %v1255
  %v1287 = vpop.xlane.xlu0 %1286
  %1288 = vadd.xlane.f32.xlu0 %v1257
  %v1289 = vpop.xlane.xlu0 %1288
  %1290 = vadd.xlane.f32.xlu0 %v1259
  %v1291 = vpop.xlane.xlu0 %1290
  %1292 = vadd.xlane.f32.xlu0 %v1261
  %v1293 = vpop.xlane.xlu0 %1292
  %1294 = vadd.xlane.f32.xlu0 %v1263
  %v1295 = vpop.xlane.xlu0 %1294
  %1296 = vadd.xlane.f32.xlu0 %v1265
  %v1297 = vpop.xlane.xlu0 %1296
  %v1298 = vlog2.pop %v1267
  %v1299 = vmul.f32 %v1298, 0.6931472
  %v1300 = vlog2.pop %v1269
  %v1301 = vmul.f32 %v1300, 0.6931472
  %v1302 = vlog2.pop %v1271
  %v1303 = vmul.f32 %v1302, 0.6931472
  %v1304 = vlog2.pop %v1273
  %v1305 = vmul.f32 %v1304, 0.6931472
  %v1306 = vlog2.pop %v1275
  %v1307 = vmul.f32 %v1306, 0.6931472
  %v1308 = vlog2.pop %v1277
  %v1309 = vmul.f32 %v1308, 0.6931472
  %v1310 = vlog2.pop %v1279
  %v1311 = vmul.f32 %v1310, 0.6931472
  %v1312 = vlog2.pop %v1281
  %v1313 = vmul.f32 %v1312, 0.6931472
  %v1314 = vlog2.pop %v1283
  %v1315 = vmul.f32 %v1314, 0.6931472
  %v1316 = vlog2.pop %v1285
  %v1317 = vmul.f32 %v1316, 0.6931472
  %v1318 = vlog2.pop %v1287
  %v1319 = vmul.f32 %v1318, 0.6931472
  %v1320 = vlog2.pop %v1289
  %v1321 = vmul.f32 %v1320, 0.6931472
  %v1322 = vlog2.pop %v1291
  %v1323 = vmul.f32 %v1322, 0.6931472
  %v1324 = vlog2.pop %v1293
  %v1325 = vmul.f32 %v1324, 0.6931472
  %v1326 = vlog2.pop %v1295
  %v1327 = vmul.f32 %v1326, 0.6931472
  %v1328 = vlog2.pop %v1297
  %v1329 = vmul.f32 %v1328, 0.6931472
  %v1330 = vsub.f32 %v1218, %v1299
  %v1331 = vsub.f32 %v1219, %v1301
  %v1332 = vsub.f32 %v1220, %v1303
  %v1333 = vsub.f32 %v1221, %v1305
  %v1334 = vsub.f32 %v1222, %v1307
  %v1335 = vsub.f32 %v1223, %v1309
  %v1336 = vsub.f32 %v1224, %v1311
  %v1337 = vsub.f32 %v1225, %v1313
  %v1338 = vsub.f32 %v1226, %v1315
  %v1339 = vsub.f32 %v1227, %v1317
  %v1340 = vsub.f32 %v1228, %v1319
  %v1341 = vsub.f32 %v1229, %v1321
  %v1342 = vsub.f32 %v1230, %v1323
  %v1343 = vsub.f32 %v1231, %v1325
  %v1344 = vsub.f32 %v1232, %v1327
  %v1345 = vsub.f32 %v1233, %v1329
  %1346 = vst [vmem:[%s10] sm:$0xff] %v1330
  %1347 = vst [vmem:[%s10 + $0x8] sm:$0xff] %v1331
  %1348 = vst [vmem:[%s10 + $0x10] sm:$0xff] %v1332
  %1349 = vst [vmem:[%s10 + $0x18] sm:$0xff] %v1333
  %1350 = vst [vmem:[%s10 + $0x20] sm:$0xff] %v1334
  %1351 = vst [vmem:[%s10 + $0x28] sm:$0xff] %v1335
  %1352 = vst [vmem:[%s10 + $0x30] sm:$0xff] %v1336
  %1353 = vst [vmem:[%s10 + $0x38] sm:$0xff] %v1337
  %1354 = vst [vmem:[%s10 + $0x40] sm:$0xff] %v1338
  %1355 = vst [vmem:[%s10 + $0x48] sm:$0xff] %v1339
  %1356 = vst [vmem:[%s10 + $0x50] sm:$0xff] %v1340
  %1357 = vst [vmem:[%s10 + $0x58] sm:$0xff] %v1341
  %1358 = vst [vmem:[%s10 + $0x60] sm:$0xff] %v1342
  %1359 = vst [vmem:[%s10 + $0x68] sm:$0xff] %v1343
  %1360 = vst [vmem:[%s10 + $0x70] sm:$0xff] %v1344
  %1361 = vst [vmem:[%s10 + $0x78] sm:$0xff] %v1345
  // Predicated region
  $region42: #{markov_gcnr_forward.1} parent=0 // pred_check
    _
  $region43: #{markov_gcnr_forward.1} parent=0 // pred_check_branch
    %1363 = sbr.rel (0) target = $region45
  $region44: #{markov_gcnr_forward.1} parent=0 // pred_region
    _
  $region45: #{markov_gcnr_forward.1} parent=0 // pred_fallthru
    _
  // Predicated region
  $region46: #{markov_gcnr_forward.1} parent=0 // pred_check
    _
  $region47: #{markov_gcnr_forward.1} parent=0 // pred_check_branch
    %1365 = sbr.rel (0) target = $region49
  $region48: #{markov_gcnr_forward.1} parent=0 // pred_region
    _
  $region49: #{markov_gcnr_forward.1} parent=0 // pred_fallthru
    _

</llo_original>
